<compile_context>
chip_gen: v7x
topology: tpu7x:2x2x1
jax: 0.10.0
libtpu: 0.0.40
codegen_flags: <defaults>
</compile_context>

<pallas_src>
import functools

import jax
import jax.numpy as jnp
from jax import lax
from jax.experimental import pallas as pl
from jax.experimental.pallas import tpu as pltpu


def gnn_encoder_kernel(src_ref, dst_ref, x_ref,
                       ws1_ref, bs1_ref, wd1_ref, bd1_ref, att1_ref, bias1_ref,
                       ws2_ref, bs2_ref, wd2_ref, bd2_ref, att2_ref, bias2_ref,
                       out_ref, *, hidden, negative_slope=0.2):
    e = src_ref.shape[0]
    n = x_ref.shape[0]
    c = hidden

    # One-hot gather/scatter operators built in-kernel from int32 indices
    # (no fp32 [E,N] matrices DMA'd from HBM). Keep only the bool masks live.
    node_iota = lax.broadcasted_iota(jnp.int32, (e, n), 1)          # [E, N]
    sb = node_iota == src_ref[...]                                  # [E, N] bool one-hot(src)
    db = node_iota == dst_ref[...]                                  # [E, N] bool one-hot(dst)
    df = db.astype(jnp.float32)                                     # f32, used twice (gather+scatter)

    def gatv2(h_in, ws_ref, bs_ref, wd_ref, bd_ref, att_ref, bias_ref, apply_relu):
        # Lane-aligned fused projections:
        #   h_s = h_in @ [wl | 0] + [bl | 1] = [x_l | 1]   ([N, C+1], x_l at lanes 0..C-1)
        #   h_d = h_in @ wr + br             = x_r         ([N, C])
        h_s = jnp.dot(h_in, ws_ref[...],
                      preferred_element_type=jnp.float32) + bs_ref[...]     # [N, C+1]
        h_d = jnp.dot(h_in, wd_ref[...],
                      preferred_element_type=jnp.float32) + bd_ref[...]     # [N, C]

        # Pre-sliced one-hot gathers (only the columns each side actually needs).
        he_s = jnp.dot(sb.astype(jnp.float32), h_s,
                       preferred_element_type=jnp.float32)                  # [E, C+1] = [x_l[src] | 1]
        xe_r = jnp.dot(df, h_d, preferred_element_type=jnp.float32)         # [E, C]   = x_r[dst]
        xe_l = he_s[:, :c]                                                  # [E, C], lane-0 aligned

        # GATv2 attention logits.
        g = xe_l + xe_r
        g = jnp.where(g > 0, g, negative_slope * g)                         # LeakyReLU(0.2)
        score = jnp.sum(g * att_ref[...], axis=-1, keepdims=True)           # [E, 1]

        # Segment softmax (grouped by destination node), max-shifted for stability.
        masked = jnp.where(db, score, jnp.float32(-1e30))                   # [E, N]
        m = jnp.max(masked, axis=0, keepdims=True)                          # [1, N]
        # m[dst] gather via VPU select + XLU lane reduce (no width-1 MXU matmul).
        me = jnp.sum(jnp.where(db, m, jnp.float32(0.0)),
                     axis=1, keepdims=True)                                 # [E, 1]
        ex = jnp.exp(score - me)                                            # [E, 1]

        # Single merged scatter: D^T @ (ex * [x_l[src] | 1]) = [unnorm agg | denom].
        rhs = ex * he_s                                                     # [E, C+1] (no slicing)
        agg = lax.dot_general(df, rhs, (((0,), (0,)), ((), ())),
                              preferred_element_type=jnp.float32)           # [N, C+1]
        num = agg[:, :c]                                                    # [N, C], lane-0 aligned
        denom = agg[:, c:]                                                  # [N, 1]

        # Node-level normalization on the EUP reciprocal slot; guard zero-in-degree
        # nodes (denom == 0 -> 0 + bias, matching softmax over an empty segment).
        denom_safe = jnp.where(denom > 0, denom, jnp.float32(1.0))
        out = jnp.where(denom > 0,
                        num * pl.reciprocal(denom_safe, approx=True),
                        jnp.float32(0.0))
        out = out + bias_ref[...]
        if apply_relu:
            out = jnp.maximum(out, 0.0)
        return out

    h1 = gatv2(x_ref[...], ws1_ref, bs1_ref, wd1_ref, bd1_ref,
               att1_ref, bias1_ref, apply_relu=True)
    out_ref[...] = gatv2(h1, ws2_ref, bs2_ref, wd2_ref, bd2_ref,
                         att2_ref, bias2_ref, apply_relu=False)


def _fuse_src_lin(p):
    # Ws = [wl | 0-col], Bs = [bl | 1]  =>  x @ Ws + Bs = [x_l | 1] (lane-0 aligned)
    in_dim = p["wl"].shape[0]
    ws = jnp.concatenate([p["wl"], jnp.zeros((in_dim, 1), jnp.float32)], axis=1)
    bs = jnp.concatenate([p["bl"], jnp.ones((1, 1), jnp.float32)], axis=1)
    return ws, bs


@jax.jit
def gnn_encoder_forward(params, x, edge_index):
    n_nodes, _ = x.shape
    hidden = params["conv1"]["wl"].shape[1]
    e = edge_index.shape[1]
    src = edge_index[0].astype(jnp.int32).reshape(e, 1)
    dst = edge_index[1].astype(jnp.int32).reshape(e, 1)

    ws1, bs1 = _fuse_src_lin(params["conv1"])
    ws2, bs2 = _fuse_src_lin(params["conv2"])

    vmem = pl.BlockSpec(memory_space=pltpu.MemorySpace.VMEM)
    kernel = functools.partial(gnn_encoder_kernel, hidden=hidden)
    return pl.pallas_call(
        kernel,
        out_shape=jax.ShapeDtypeStruct((n_nodes, hidden), jnp.float32),
        in_specs=[vmem] * 15,
        out_specs=vmem,
        compiler_params=pltpu.CompilerParams(vmem_limit_bytes=32 * 1024 * 1024),
    )(src, dst, x,
      ws1, bs1, params["conv1"]["wr"], params["conv1"]["br"],
      params["conv1"]["att"], params["conv1"]["bias"],
      ws2, bs2, params["conv2"]["wr"], params["conv2"]["br"],
      params["conv2"]["att"], params["conv2"]["bias"])


# ----- deterministic parameter init (shapes from GATv2Conv((-1,-1), 32)) -----
def _glorot(key, shape):
    fan_in, fan_out = shape
    limit = (6.0 / (fan_in + fan_out)) ** 0.5
    return jax.random.uniform(key, shape, jnp.float32, -limit, limit)


def init_gatv2_params(key, in_dim, out_dim):
    k1, k2, k3 = jax.random.split(key, 3)
    return {
        "wl": _glorot(k1, (in_dim, out_dim)),        # lin_l weight
        "bl": jnp.zeros((1, out_dim), jnp.float32),  # lin_l bias
        "wr": _glorot(k2, (in_dim, out_dim)),        # lin_r weight
        "br": jnp.zeros((1, out_dim), jnp.float32),  # lin_r bias
        "att": _glorot(k3, (1, out_dim)),            # attention vector (heads=1)
        "bias": jnp.zeros((1, out_dim), jnp.float32),
    }


def init_gnn_encoder_params(key, in_dim, hidden):
    k1, k2 = jax.random.split(key)
    return {
        "conv1": init_gatv2_params(k1, in_dim, hidden),
        "conv2": init_gatv2_params(k2, hidden, hidden),
    }


# ----- pure-JAX reference (segment ops) for correctness check -----
def gatv2_reference(x, edge_index, p, *, apply_relu):
    src, dst = edge_index[0], edge_index[1]
    n = x.shape[0]
    xl = x @ p["wl"] + p["bl"]
    xr = x @ p["wr"] + p["br"]
    h = xl[src] + xr[dst]
    h = jnp.where(h > 0, h, 0.2 * h)
    score = jnp.sum(h * p["att"], axis=-1)
    m = jax.ops.segment_max(score, dst, num_segments=n)
    ex = jnp.exp(score - m[dst])
    den = jax.ops.segment_sum(ex, dst, num_segments=n)
    alpha = ex / den[dst]
    out = jax.ops.segment_sum(alpha[:, None] * xl[src], dst, num_segments=n) + p["bias"]
    if apply_relu:
        out = jnp.maximum(out, 0.0)
    return out


def gnn_encoder_reference(params, x, edge_index):
    x = gatv2_reference(x, edge_index, params["conv1"], apply_relu=True)
    x = gatv2_reference(x, edge_index, params["conv2"], apply_relu=False)
    return x


if __name__ == "__main__":
    N, F_IN, HIDDEN, E = 16, 8, 32, 48
    key = jax.random.PRNGKey(0)
    kx, ks, kd, kp = jax.random.split(key, 4)

    x = jax.random.normal(kx, (N, F_IN), jnp.float32)                # node features
    src = jax.random.randint(ks, (E,), 0, N)
    dst = jax.random.randint(kd, (E,), 0, N)
    edge_index = jnp.stack([src, dst], axis=0)                       # [2, E]

    params = init_gnn_encoder_params(kp, F_IN, HIDDEN)

    out = gnn_encoder_forward(params, x, edge_index)
    out = jax.block_until_ready(out)

    ref = gnn_encoder_reference(params, x, edge_index)
    assert out.shape == (N, HIDDEN)
    err = float(jnp.max(jnp.abs(out - ref)))
    # Tolerance loosened to 5e-3 for the approx (EUP vrcp) reciprocal path.
    assert jnp.allclose(out, ref, atol=5e-3, rtol=5e-3), err
    print("KERNEL_OK")
</pallas_src>

<mosaic_0001>
module attributes {stable_mosaic.version = 11 : i64} {
  func.func @gnn_encoder_kernel(%arg0: memref<48x1xi32, #tpu.memory_space<vmem>>, %arg1: memref<48x1xi32, #tpu.memory_space<vmem>>, %arg2: memref<16x8xf32, #tpu.memory_space<vmem>>, %arg3: memref<8x33xf32, #tpu.memory_space<vmem>>, %arg4: memref<1x33xf32, #tpu.memory_space<vmem>>, %arg5: memref<8x32xf32, #tpu.memory_space<vmem>>, %arg6: memref<1x32xf32, #tpu.memory_space<vmem>>, %arg7: memref<1x32xf32, #tpu.memory_space<vmem>>, %arg8: memref<1x32xf32, #tpu.memory_space<vmem>>, %arg9: memref<32x33xf32, #tpu.memory_space<vmem>>, %arg10: memref<1x33xf32, #tpu.memory_space<vmem>>, %arg11: memref<32x32xf32, #tpu.memory_space<vmem>>, %arg12: memref<1x32xf32, #tpu.memory_space<vmem>>, %arg13: memref<1x32xf32, #tpu.memory_space<vmem>>, %arg14: memref<1x32xf32, #tpu.memory_space<vmem>>, %arg15: memref<16x32xf32, #tpu.memory_space<vmem>>) attributes {dimension_semantics = [], scalar_prefetch = 0 : i64, scratch_operands = 0 : i64, tpu.core_type = #tpu.core_type<tc>} {
    %0 = tpu.iota {dimensions = array<i32: 1>} : vector<48x16xi32>
    %c0 = arith.constant 0 : index
    %c0_0 = arith.constant 0 : index
    %1 = vector.load %arg0[%c0, %c0_0] : memref<48x1xi32, #tpu.memory_space<vmem>>, vector<48x1xi32>
    %2 = vector.broadcast %1 : vector<48x1xi32> to vector<48x16xi32>
    %3 = arith.cmpi eq, %0, %2 : vector<48x16xi32>
    %c0_1 = arith.constant 0 : index
    %c0_2 = arith.constant 0 : index
    %4 = vector.load %arg1[%c0_1, %c0_2] : memref<48x1xi32, #tpu.memory_space<vmem>>, vector<48x1xi32>
    %5 = vector.broadcast %4 : vector<48x1xi32> to vector<48x16xi32>
    %6 = arith.cmpi eq, %0, %5 : vector<48x16xi32>
    %7 = arith.extui %6 : vector<48x16xi1> to vector<48x16xi32>
    %8 = arith.sitofp %7 : vector<48x16xi32> to vector<48x16xf32>
    %c0_3 = arith.constant 0 : index
    %c0_4 = arith.constant 0 : index
    %9 = vector.load %arg2[%c0_3, %c0_4] : memref<16x8xf32, #tpu.memory_space<vmem>>, vector<16x8xf32>
    %c0_5 = arith.constant 0 : index
    %c0_6 = arith.constant 0 : index
    %10 = vector.load %arg3[%c0_5, %c0_6] : memref<8x33xf32, #tpu.memory_space<vmem>>, vector<8x33xf32>
    %cst = arith.constant dense<0.000000e+00> : vector<16x33xf32>
    %11 = tpu.matmul %9, %10, %cst {dimension_numbers = #tpu.dot_dimension_numbers<[1], [0], [0], [1], [0, 0, 1, 1], [], []>} : vector<16x8xf32>, vector<8x33xf32>, vector<16x33xf32> -> vector<16x33xf32>
    %c0_7 = arith.constant 0 : index
    %c0_8 = arith.constant 0 : index
    %12 = vector.load %arg4[%c0_7, %c0_8] : memref<1x33xf32, #tpu.memory_space<vmem>>, vector<1x33xf32>
    %13 = vector.broadcast %12 : vector<1x33xf32> to vector<16x33xf32>
    %14 = arith.addf %11, %13 : vector<16x33xf32>
    %c0_9 = arith.constant 0 : index
    %c0_10 = arith.constant 0 : index
    %15 = vector.load %arg5[%c0_9, %c0_10] : memref<8x32xf32, #tpu.memory_space<vmem>>, vector<8x32xf32>
    %cst_11 = arith.constant dense<0.000000e+00> : vector<16x32xf32>
    %16 = tpu.matmul %9, %15, %cst_11 {dimension_numbers = #tpu.dot_dimension_numbers<[1], [0], [0], [1], [0, 0, 1, 1], [], []>} : vector<16x8xf32>, vector<8x32xf32>, vector<16x32xf32> -> vector<16x32xf32>
    %c0_12 = arith.constant 0 : index
    %c0_13 = arith.constant 0 : index
    %17 = vector.load %arg6[%c0_12, %c0_13] : memref<1x32xf32, #tpu.memory_space<vmem>>, vector<1x32xf32>
    %18 = vector.broadcast %17 : vector<1x32xf32> to vector<16x32xf32>
    %19 = arith.addf %16, %18 : vector<16x32xf32>
    %20 = arith.extui %3 : vector<48x16xi1> to vector<48x16xi32>
    %21 = arith.sitofp %20 : vector<48x16xi32> to vector<48x16xf32>
    %cst_14 = arith.constant dense<0.000000e+00> : vector<48x33xf32>
    %22 = tpu.matmul %21, %14, %cst_14 {dimension_numbers = #tpu.dot_dimension_numbers<[1], [0], [0], [1], [0, 0, 1, 1], [], []>} : vector<48x16xf32>, vector<16x33xf32>, vector<48x33xf32> -> vector<48x33xf32>
    %cst_15 = arith.constant dense<0.000000e+00> : vector<48x32xf32>
    %23 = tpu.matmul %8, %19, %cst_15 {dimension_numbers = #tpu.dot_dimension_numbers<[1], [0], [0], [1], [0, 0, 1, 1], [], []>} : vector<48x16xf32>, vector<16x32xf32>, vector<48x32xf32> -> vector<48x32xf32>
    %24 = vector.extract_strided_slice %22 {offsets = [0, 0], sizes = [48, 32], strides = [1, 1]} : vector<48x33xf32> to vector<48x32xf32>
    %25 = arith.addf %24, %23 : vector<48x32xf32>
    %cst_16 = arith.constant 0.000000e+00 : f32
    %26 = vector.broadcast %cst_16 : f32 to vector<48x32xf32>
    %27 = arith.cmpf ogt, %25, %26 : vector<48x32xf32>
    %cst_17 = arith.constant 2.000000e-01 : f32
    %28 = vector.broadcast %cst_17 : f32 to vector<48x32xf32>
    %29 = arith.mulf %28, %25 : vector<48x32xf32>
    %30 = arith.select %27, %25, %29 : vector<48x32xi1>, vector<48x32xf32>
    %c0_18 = arith.constant 0 : index
    %c0_19 = arith.constant 0 : index
    %31 = vector.load %arg7[%c0_18, %c0_19] : memref<1x32xf32, #tpu.memory_space<vmem>>, vector<1x32xf32>
    %32 = vector.broadcast %31 : vector<1x32xf32> to vector<48x32xf32>
    %33 = arith.mulf %30, %32 : vector<48x32xf32>
    %cst_20 = arith.constant dense<0.000000e+00> : vector<48xf32>
    %34 = vector.multi_reduction <add>, %33, %cst_20 [1] : vector<48x32xf32> to vector<48xf32>
    %35 = vector.shape_cast %34 : vector<48xf32> to vector<48x1xf32>
    %cst_21 = arith.constant -1.000000e+30 : f32
    %36 = vector.shape_cast %35 : vector<48x1xf32> to vector<48x1xf32>
    %37 = vector.broadcast %36 : vector<48x1xf32> to vector<48x16xf32>
    %38 = vector.broadcast %cst_21 : f32 to vector<48x16xf32>
    %39 = arith.select %6, %37, %38 : vector<48x16xi1>, vector<48x16xf32>
    %cst_22 = arith.constant dense<0xFF800000> : vector<16xf32>
    %40 = vector.multi_reduction <maximumf>, %39, %cst_22 [0] : vector<48x16xf32> to vector<16xf32>
    %41 = vector.shape_cast %40 : vector<16xf32> to vector<1x16xf32>
    %cst_23 = arith.constant 0.000000e+00 : f32
    %42 = vector.shape_cast %41 : vector<1x16xf32> to vector<1x16xf32>
    %43 = vector.broadcast %42 : vector<1x16xf32> to vector<48x16xf32>
    %44 = vector.broadcast %cst_23 : f32 to vector<48x16xf32>
    %45 = arith.select %6, %43, %44 : vector<48x16xi1>, vector<48x16xf32>
    %cst_24 = arith.constant dense<0.000000e+00> : vector<48xf32>
    %46 = vector.multi_reduction <add>, %45, %cst_24 [1] : vector<48x16xf32> to vector<48xf32>
    %47 = vector.shape_cast %46 : vector<48xf32> to vector<48x1xf32>
    %48 = arith.subf %35, %47 : vector<48x1xf32>
    %49 = math.exp %48 : vector<48x1xf32>
    %50 = vector.broadcast %49 : vector<48x1xf32> to vector<48x33xf32>
    %51 = arith.mulf %50, %22 : vector<48x33xf32>
    %cst_25 = arith.constant dense<0.000000e+00> : vector<16x33xf32>
    %52 = tpu.matmul %8, %51, %cst_25 {dimension_numbers = #tpu.dot_dimension_numbers<[0], [0], [1], [1], [0, 1, 1, 1], [], []>} : vector<48x16xf32>, vector<48x33xf32>, vector<16x33xf32> -> vector<16x33xf32>
    %53 = vector.extract_strided_slice %52 {offsets = [0, 0], sizes = [16, 32], strides = [1, 1]} : vector<16x33xf32> to vector<16x32xf32>
    %54 = vector.extract_strided_slice %52 {offsets = [0, 32], sizes = [16, 1], strides = [1, 1]} : vector<16x33xf32> to vector<16x1xf32>
    %cst_26 = arith.constant 0.000000e+00 : f32
    %55 = vector.broadcast %cst_26 : f32 to vector<16x1xf32>
    %56 = arith.cmpf ogt, %54, %55 : vector<16x1xf32>
    %cst_27 = arith.constant 1.000000e+00 : f32
    %57 = vector.broadcast %cst_27 : f32 to vector<16x1xf32>
    %58 = arith.select %56, %54, %57 : vector<16x1xi1>, vector<16x1xf32>
    %cst_28 = arith.constant 0.000000e+00 : f32
    %59 = vector.broadcast %cst_28 : f32 to vector<16x1xf32>
    %60 = arith.cmpf ogt, %54, %59 : vector<16x1xf32>
    %61 = tpu.reciprocal %58 {approx = true} : vector<16x1xf32> -> vector<16x1xf32>
    %62 = vector.broadcast %61 : vector<16x1xf32> to vector<16x32xf32>
    %63 = arith.mulf %53, %62 : vector<16x32xf32>
    %cst_29 = arith.constant 0.000000e+00 : f32
    %64 = vector.shape_cast %60 : vector<16x1xi1> to vector<16x1xi1>
    %65 = vector.broadcast %64 : vector<16x1xi1> to vector<16x32xi1>
    %66 = vector.broadcast %cst_29 : f32 to vector<16x32xf32>
    %67 = arith.select %65, %63, %66 : vector<16x32xi1>, vector<16x32xf32>
    %c0_30 = arith.constant 0 : index
    %c0_31 = arith.constant 0 : index
    %68 = vector.load %arg8[%c0_30, %c0_31] : memref<1x32xf32, #tpu.memory_space<vmem>>, vector<1x32xf32>
    %69 = vector.broadcast %68 : vector<1x32xf32> to vector<16x32xf32>
    %70 = arith.addf %67, %69 : vector<16x32xf32>
    %cst_32 = arith.constant 0.000000e+00 : f32
    %71 = vector.broadcast %cst_32 : f32 to vector<16x32xf32>
    %72 = arith.maximumf %70, %71 : vector<16x32xf32>
    %c0_33 = arith.constant 0 : index
    %c0_34 = arith.constant 0 : index
    %73 = vector.load %arg9[%c0_33, %c0_34] : memref<32x33xf32, #tpu.memory_space<vmem>>, vector<32x33xf32>
    %cst_35 = arith.constant dense<0.000000e+00> : vector<16x33xf32>
    %74 = tpu.matmul %72, %73, %cst_35 {dimension_numbers = #tpu.dot_dimension_numbers<[1], [0], [0], [1], [0, 0, 1, 1], [], []>} : vector<16x32xf32>, vector<32x33xf32>, vector<16x33xf32> -> vector<16x33xf32>
    %c0_36 = arith.constant 0 : index
    %c0_37 = arith.constant 0 : index
    %75 = vector.load %arg10[%c0_36, %c0_37] : memref<1x33xf32, #tpu.memory_space<vmem>>, vector<1x33xf32>
    %76 = vector.broadcast %75 : vector<1x33xf32> to vector<16x33xf32>
    %77 = arith.addf %74, %76 : vector<16x33xf32>
    %c0_38 = arith.constant 0 : index
    %c0_39 = arith.constant 0 : index
    %78 = vector.load %arg11[%c0_38, %c0_39] : memref<32x32xf32, #tpu.memory_space<vmem>>, vector<32x32xf32>
    %cst_40 = arith.constant dense<0.000000e+00> : vector<16x32xf32>
    %79 = tpu.matmul %72, %78, %cst_40 {dimension_numbers = #tpu.dot_dimension_numbers<[1], [0], [0], [1], [0, 0, 1, 1], [], []>} : vector<16x32xf32>, vector<32x32xf32>, vector<16x32xf32> -> vector<16x32xf32>
    %c0_41 = arith.constant 0 : index
    %c0_42 = arith.constant 0 : index
    %80 = vector.load %arg12[%c0_41, %c0_42] : memref<1x32xf32, #tpu.memory_space<vmem>>, vector<1x32xf32>
    %81 = vector.broadcast %80 : vector<1x32xf32> to vector<16x32xf32>
    %82 = arith.addf %79, %81 : vector<16x32xf32>
    %83 = arith.extui %3 : vector<48x16xi1> to vector<48x16xi32>
    %84 = arith.sitofp %83 : vector<48x16xi32> to vector<48x16xf32>
    %cst_43 = arith.constant dense<0.000000e+00> : vector<48x33xf32>
    %85 = tpu.matmul %84, %77, %cst_43 {dimension_numbers = #tpu.dot_dimension_numbers<[1], [0], [0], [1], [0, 0, 1, 1], [], []>} : vector<48x16xf32>, vector<16x33xf32>, vector<48x33xf32> -> vector<48x33xf32>
    %cst_44 = arith.constant dense<0.000000e+00> : vector<48x32xf32>
    %86 = tpu.matmul %8, %82, %cst_44 {dimension_numbers = #tpu.dot_dimension_numbers<[1], [0], [0], [1], [0, 0, 1, 1], [], []>} : vector<48x16xf32>, vector<16x32xf32>, vector<48x32xf32> -> vector<48x32xf32>
    %87 = vector.extract_strided_slice %85 {offsets = [0, 0], sizes = [48, 32], strides = [1, 1]} : vector<48x33xf32> to vector<48x32xf32>
    %88 = arith.addf %87, %86 : vector<48x32xf32>
    %cst_45 = arith.constant 0.000000e+00 : f32
    %89 = vector.broadcast %cst_45 : f32 to vector<48x32xf32>
    %90 = arith.cmpf ogt, %88, %89 : vector<48x32xf32>
    %cst_46 = arith.constant 2.000000e-01 : f32
    %91 = vector.broadcast %cst_46 : f32 to vector<48x32xf32>
    %92 = arith.mulf %91, %88 : vector<48x32xf32>
    %93 = arith.select %90, %88, %92 : vector<48x32xi1>, vector<48x32xf32>
    %c0_47 = arith.constant 0 : index
    %c0_48 = arith.constant 0 : index
    %94 = vector.load %arg13[%c0_47, %c0_48] : memref<1x32xf32, #tpu.memory_space<vmem>>, vector<1x32xf32>
    %95 = vector.broadcast %94 : vector<1x32xf32> to vector<48x32xf32>
    %96 = arith.mulf %93, %95 : vector<48x32xf32>
    %cst_49 = arith.constant dense<0.000000e+00> : vector<48xf32>
    %97 = vector.multi_reduction <add>, %96, %cst_49 [1] : vector<48x32xf32> to vector<48xf32>
    %98 = vector.shape_cast %97 : vector<48xf32> to vector<48x1xf32>
    %cst_50 = arith.constant -1.000000e+30 : f32
    %99 = vector.shape_cast %98 : vector<48x1xf32> to vector<48x1xf32>
    %100 = vector.broadcast %99 : vector<48x1xf32> to vector<48x16xf32>
    %101 = vector.broadcast %cst_50 : f32 to vector<48x16xf32>
    %102 = arith.select %6, %100, %101 : vector<48x16xi1>, vector<48x16xf32>
    %cst_51 = arith.constant dense<0xFF800000> : vector<16xf32>
    %103 = vector.multi_reduction <maximumf>, %102, %cst_51 [0] : vector<48x16xf32> to vector<16xf32>
    %104 = vector.shape_cast %103 : vector<16xf32> to vector<1x16xf32>
    %cst_52 = arith.constant 0.000000e+00 : f32
    %105 = vector.shape_cast %104 : vector<1x16xf32> to vector<1x16xf32>
    %106 = vector.broadcast %105 : vector<1x16xf32> to vector<48x16xf32>
    %107 = vector.broadcast %cst_52 : f32 to vector<48x16xf32>
    %108 = arith.select %6, %106, %107 : vector<48x16xi1>, vector<48x16xf32>
    %cst_53 = arith.constant dense<0.000000e+00> : vector<48xf32>
    %109 = vector.multi_reduction <add>, %108, %cst_53 [1] : vector<48x16xf32> to vector<48xf32>
    %110 = vector.shape_cast %109 : vector<48xf32> to vector<48x1xf32>
    %111 = arith.subf %98, %110 : vector<48x1xf32>
    %112 = math.exp %111 : vector<48x1xf32>
    %113 = vector.broadcast %112 : vector<48x1xf32> to vector<48x33xf32>
    %114 = arith.mulf %113, %85 : vector<48x33xf32>
    %cst_54 = arith.constant dense<0.000000e+00> : vector<16x33xf32>
    %115 = tpu.matmul %8, %114, %cst_54 {dimension_numbers = #tpu.dot_dimension_numbers<[0], [0], [1], [1], [0, 1, 1, 1], [], []>} : vector<48x16xf32>, vector<48x33xf32>, vector<16x33xf32> -> vector<16x33xf32>
    %116 = vector.extract_strided_slice %115 {offsets = [0, 0], sizes = [16, 32], strides = [1, 1]} : vector<16x33xf32> to vector<16x32xf32>
    %117 = vector.extract_strided_slice %115 {offsets = [0, 32], sizes = [16, 1], strides = [1, 1]} : vector<16x33xf32> to vector<16x1xf32>
    %cst_55 = arith.constant 0.000000e+00 : f32
    %118 = vector.broadcast %cst_55 : f32 to vector<16x1xf32>
    %119 = arith.cmpf ogt, %117, %118 : vector<16x1xf32>
    %cst_56 = arith.constant 1.000000e+00 : f32
    %120 = vector.broadcast %cst_56 : f32 to vector<16x1xf32>
    %121 = arith.select %119, %117, %120 : vector<16x1xi1>, vector<16x1xf32>
    %cst_57 = arith.constant 0.000000e+00 : f32
    %122 = vector.broadcast %cst_57 : f32 to vector<16x1xf32>
    %123 = arith.cmpf ogt, %117, %122 : vector<16x1xf32>
    %124 = tpu.reciprocal %121 {approx = true} : vector<16x1xf32> -> vector<16x1xf32>
    %125 = vector.broadcast %124 : vector<16x1xf32> to vector<16x32xf32>
    %126 = arith.mulf %116, %125 : vector<16x32xf32>
    %cst_58 = arith.constant 0.000000e+00 : f32
    %127 = vector.shape_cast %123 : vector<16x1xi1> to vector<16x1xi1>
    %128 = vector.broadcast %127 : vector<16x1xi1> to vector<16x32xi1>
    %129 = vector.broadcast %cst_58 : f32 to vector<16x32xf32>
    %130 = arith.select %128, %126, %129 : vector<16x32xi1>, vector<16x32xf32>
    %c0_59 = arith.constant 0 : index
    %c0_60 = arith.constant 0 : index
    %131 = vector.load %arg14[%c0_59, %c0_60] : memref<1x32xf32, #tpu.memory_space<vmem>>, vector<1x32xf32>
    %132 = vector.broadcast %131 : vector<1x32xf32> to vector<16x32xf32>
    %133 = arith.addf %130, %132 : vector<16x32xf32>
    %c0_61 = arith.constant 0 : index
    %c0_62 = arith.constant 0 : index
    %134 = vector.load %arg15[%c0_61, %c0_62] : memref<16x32xf32, #tpu.memory_space<vmem>>, vector<16x32xf32>
    tpu.vector_store %arg15[%c0_61, %c0_62], %133 {strides = array<i32>} : memref<16x32xf32, #tpu.memory_space<vmem>>, vector<16x32xf32>,
    return
  }
}

</mosaic_0001>

<llo_original>
// kernel: gnn_encoder_forward.1
$region0: #{gnn_encoder_forward.1}
  #allocation0 [shape = 'u32[]', space=smem, size = 0x4, offset = 0x4, fixed_abs, tag = 'smem constant byte address 0x4 - core index']
  #allocation1 [shape = 'u32[144,128]{1,0:T(1,128)}', space=vmem, size = 0x12000, scoped, tag = 'internal scratch']
  %s0 = inlined_call_operand.vmem [shape: s32[48,1], index: 0, kind: input, shape index: {}]
  %s1 = inlined_call_operand.vmem [shape: s32[48,1], index: 1, kind: input, shape index: {}]
  %s2 = inlined_call_operand.vmem [shape: f32[16,8], index: 2, kind: input, shape index: {}]
  %s3 = inlined_call_operand.vmem [shape: f32[8,33], index: 3, kind: input, shape index: {}]
  %s4 = inlined_call_operand.vmem [shape: f32[1,33], index: 4, kind: input, shape index: {}]
  %s5 = inlined_call_operand.vmem [shape: f32[8,32], index: 5, kind: input, shape index: {}]
  %s6 = inlined_call_operand.vmem [shape: f32[1,32], index: 6, kind: input, shape index: {}]
  %s7 = inlined_call_operand.vmem [shape: f32[1,32], index: 7, kind: input, shape index: {}]
  %s8 = inlined_call_operand.vmem [shape: f32[1,32], index: 8, kind: input, shape index: {}]
  %s9 = inlined_call_operand.vmem [shape: f32[32,33], index: 9, kind: input, shape index: {}]
  %s10 = inlined_call_operand.vmem [shape: f32[1,33], index: 10, kind: input, shape index: {}]
  %s11 = inlined_call_operand.vmem [shape: f32[32,32], index: 11, kind: input, shape index: {}]
  %s12 = inlined_call_operand.vmem [shape: f32[1,32], index: 12, kind: input, shape index: {}]
  %s13 = inlined_call_operand.vmem [shape: f32[1,32], index: 13, kind: input, shape index: {}]
  %s14 = inlined_call_operand.vmem [shape: f32[1,32], index: 14, kind: input, shape index: {}]
  %s15 = inlined_call_operand.hbm [shape: f32[16,32], index: 15, kind: output, shape index: {}]
  %s16 = sld [smem:[#allocation0]]
  $region70: #{gnn_encoder_forward.1} parent=0
    _
  %s18 = ssub.s32 1, %s16
  %s19 = scalar_select 0, %s18, %s16
  $region1: #{gnn_encoder_forward.1} parent=0
    #allocation2 [shape = 'u8[8192]{0}', space=vmem, size = 0x2000, scoped, tag = 'output window, operand 0, single buffered']
    #allocation3 [shape = 's32[1]{0}', space=sflag, size = 0x4, scoped, tag = 'scoped memory for gnn_encoder_forward.1']
    %20 = vsyncpa [#allocation3], 0
    // Predicated region
    $region2: #{gnn_encoder_forward.1} parent=1 // pred_check
      _
    $region3: #{gnn_encoder_forward.1} parent=1 // pred_check_branch
      %22 = sbr.rel (0) target = $region5
    $region4: #{gnn_encoder_forward.1} parent=1 // pred_region
      _
    $region5: #{gnn_encoder_forward.1} parent=1 // pred_fallthru
      _
    // Predicated region
    $region6: #{gnn_encoder_forward.1} parent=1 // pred_check
      _
    $region7: #{gnn_encoder_forward.1} parent=1 // pred_check_branch
      %24 = sbr.rel (0) target = $region9
    $region8: #{gnn_encoder_forward.1} parent=1 // pred_region
      _
    $region9: #{gnn_encoder_forward.1} parent=1 // pred_fallthru
      _
    // Predicated region
    $region10: #{gnn_encoder_forward.1} parent=1 // pred_check
      _
    $region11: #{gnn_encoder_forward.1} parent=1 // pred_check_branch
      %26 = sbr.rel (0) target = $region13
    $region12: #{gnn_encoder_forward.1} parent=1 // pred_region
      _
    $region13: #{gnn_encoder_forward.1} parent=1 // pred_fallthru
      _
    // Predicated region
    $region14: #{gnn_encoder_forward.1} parent=1 // pred_check
      _
    $region15: #{gnn_encoder_forward.1} parent=1 // pred_check_branch
      %28 = sbr.rel (0) target = $region17
    $region16: #{gnn_encoder_forward.1} parent=1 // pred_region
      _
    $region17: #{gnn_encoder_forward.1} parent=1 // pred_fallthru
      _
    // Predicated region
    $region18: #{gnn_encoder_forward.1} parent=1 // pred_check
      _
    $region19: #{gnn_encoder_forward.1} parent=1 // pred_check_branch
      %30 = sbr.rel (0) target = $region21
    $region20: #{gnn_encoder_forward.1} parent=1 // pred_region
      _
    $region21: #{gnn_encoder_forward.1} parent=1 // pred_fallthru
      _
    // Predicated region
    $region22: #{gnn_encoder_forward.1} parent=1 // pred_check
      _
    $region23: #{gnn_encoder_forward.1} parent=1 // pred_check_branch
      %32 = sbr.rel (0) target = $region25
    $region24: #{gnn_encoder_forward.1} parent=1 // pred_region
      _
    $region25: #{gnn_encoder_forward.1} parent=1 // pred_fallthru
      _
    // Predicated region
    $region26: #{gnn_encoder_forward.1} parent=1 // pred_check
      _
    $region27: #{gnn_encoder_forward.1} parent=1 // pred_check_branch
      %34 = sbr.rel (0) target = $region29
    $region28: #{gnn_encoder_forward.1} parent=1 // pred_region
      _
    $region29: #{gnn_encoder_forward.1} parent=1 // pred_fallthru
      _
    // Predicated region
    $region30: #{gnn_encoder_forward.1} parent=1 // pred_check
      _
    $region31: #{gnn_encoder_forward.1} parent=1 // pred_check_branch
      %36 = sbr.rel (0) target = $region33
    $region32: #{gnn_encoder_forward.1} parent=1 // pred_region
      _
    $region33: #{gnn_encoder_forward.1} parent=1 // pred_fallthru
      _
    // Predicated region
    $region34: #{gnn_encoder_forward.1} parent=1 // pred_check
      _
    $region35: #{gnn_encoder_forward.1} parent=1 // pred_check_branch
      %38 = sbr.rel (0) target = $region37
    $region36: #{gnn_encoder_forward.1} parent=1 // pred_region
      _
    $region37: #{gnn_encoder_forward.1} parent=1 // pred_fallthru
      _
    // Predicated region
    $region38: #{gnn_encoder_forward.1} parent=1 // pred_check
      _
    $region39: #{gnn_encoder_forward.1} parent=1 // pred_check_branch
      %40 = sbr.rel (0) target = $region41
    $region40: #{gnn_encoder_forward.1} parent=1 // pred_region
      _
    $region41: #{gnn_encoder_forward.1} parent=1 // pred_fallthru
      _
    // Predicated region
    $region42: #{gnn_encoder_forward.1} parent=1 // pred_check
      _
    $region43: #{gnn_encoder_forward.1} parent=1 // pred_check_branch
      %42 = sbr.rel (0) target = $region45
    $region44: #{gnn_encoder_forward.1} parent=1 // pred_region
      _
    $region45: #{gnn_encoder_forward.1} parent=1 // pred_fallthru
      _
    // Predicated region
    $region46: #{gnn_encoder_forward.1} parent=1 // pred_check
      _
    $region47: #{gnn_encoder_forward.1} parent=1 // pred_check_branch
      %44 = sbr.rel (0) target = $region49
    $region48: #{gnn_encoder_forward.1} parent=1 // pred_region
      _
    $region49: #{gnn_encoder_forward.1} parent=1 // pred_fallthru
      _
    // Predicated region
    $region50: #{gnn_encoder_forward.1} parent=1 // pred_check
      _
    $region51: #{gnn_encoder_forward.1} parent=1 // pred_check_branch
      %46 = sbr.rel (0) target = $region53
    $region52: #{gnn_encoder_forward.1} parent=1 // pred_region
      _
    $region53: #{gnn_encoder_forward.1} parent=1 // pred_fallthru
      _
    // Predicated region
    $region54: #{gnn_encoder_forward.1} parent=1 // pred_check
      _
    $region55: #{gnn_encoder_forward.1} parent=1 // pred_check_branch
      %48 = sbr.rel (0) target = $region57
    $region56: #{gnn_encoder_forward.1} parent=1 // pred_region
      _
    $region57: #{gnn_encoder_forward.1} parent=1 // pred_fallthru
      _
    // Predicated region
    $region58: #{gnn_encoder_forward.1} parent=1 // pred_check
      _
    $region59: #{gnn_encoder_forward.1} parent=1 // pred_check_branch
      %50 = sbr.rel (0) target = $region61
    $region60: #{gnn_encoder_forward.1} parent=1 // pred_region
      _
    $region61: #{gnn_encoder_forward.1} parent=1 // pred_fallthru
      _
    %v51 = vlaneseq
    %v52 = vand.u32 %v51, 127
    %v53 = vld [vmem:[%s0] sm:$0xff]
    %v54 = vld [vmem:[%s0 + $0x8] sm:$0xff]
    %v55 = vld [vmem:[%s0 + $0x10] sm:$0xff]
    %v56 = vld [vmem:[%s0 + $0x18] sm:$0xff]
    %v57 = vld [vmem:[%s0 + $0x20] sm:$0xff]
    %v58 = vld [vmem:[%s0 + $0x28] sm:$0xff]
    %59 = vset.pattern.permute.xlu0 0
    %60 = vperm.xlu0 %59, %v53
    %v61 = vpop.permute.xlu0 %60
    %62 = vset.pattern.permute.xlu0 0
    %63 = vperm.xlu0 %62, %v54
    %v64 = vpop.permute.xlu0 %63
    %65 = vset.pattern.permute.xlu0 0
    %66 = vperm.xlu0 %65, %v55
    %v67 = vpop.permute.xlu0 %66
    %68 = vset.pattern.permute.xlu0 0
    %69 = vperm.xlu0 %68, %v56
    %v70 = vpop.permute.xlu0 %69
    %71 = vset.pattern.permute.xlu0 0
    %72 = vperm.xlu0 %71, %v57
    %v73 = vpop.permute.xlu0 %72
    %74 = vset.pattern.permute.xlu0 0
    %75 = vperm.xlu0 %74, %v58
    %v76 = vpop.permute.xlu0 %75
    %vm77 = vcmp.eq.s32.totalorder %v52, %v61
    %vm78 = vcmp.eq.s32.totalorder %v52, %v64
    %vm79 = vcmp.eq.s32.totalorder %v52, %v67
    %vm80 = vcmp.eq.s32.totalorder %v52, %v70
    %vm81 = vcmp.eq.s32.totalorder %v52, %v73
    %vm82 = vcmp.eq.s32.totalorder %v52, %v76
    %v83 = vld [vmem:[%s1] sm:$0xff]
    %v84 = vld [vmem:[%s1 + $0x8] sm:$0xff]
    %v85 = vld [vmem:[%s1 + $0x10] sm:$0xff]
    %v86 = vld [vmem:[%s1 + $0x18] sm:$0xff]
    %v87 = vld [vmem:[%s1 + $0x20] sm:$0xff]
    %v88 = vld [vmem:[%s1 + $0x28] sm:$0xff]
    %89 = vset.pattern.permute.xlu0 0
    %90 = vperm.xlu0 %89, %v83
    %v91 = vpop.permute.xlu0 %90
    %92 = vset.pattern.permute.xlu0 0
    %93 = vperm.xlu0 %92, %v84
    %v94 = vpop.permute.xlu0 %93
    %95 = vset.pattern.permute.xlu0 0
    %96 = vperm.xlu0 %95, %v85
    %v97 = vpop.permute.xlu0 %96
    %98 = vset.pattern.permute.xlu0 0
    %99 = vperm.xlu0 %98, %v86
    %v100 = vpop.permute.xlu0 %99
    %101 = vset.pattern.permute.xlu0 0
    %102 = vperm.xlu0 %101, %v87
    %v103 = vpop.permute.xlu0 %102
    %104 = vset.pattern.permute.xlu0 0
    %105 = vperm.xlu0 %104, %v88
    %v106 = vpop.permute.xlu0 %105
    %vm107 = vcmp.eq.s32.totalorder %v52, %v91
    %vm108 = vcmp.eq.s32.totalorder %v52, %v94
    %vm109 = vcmp.eq.s32.totalorder %v52, %v97
    %vm110 = vcmp.eq.s32.totalorder %v52, %v100
    %vm111 = vcmp.eq.s32.totalorder %v52, %v103
    %vm112 = vcmp.eq.s32.totalorder %v52, %v106
    %v113 = vsel %vm107, 1, 0
    %v114 = vsel %vm108, 1, 0
    %v115 = vsel %vm109, 1, 0
    %v116 = vsel %vm110, 1, 0
    %v117 = vsel %vm111, 1, 0
    %v118 = vsel %vm112, 1, 0
    %v119 = vcvt.s32.f32 %v113
    %v120 = vcvt.s32.f32 %v114
    %v121 = vcvt.s32.f32 %v115
    %v122 = vcvt.s32.f32 %v116
    %v123 = vcvt.s32.f32 %v117
    %v124 = vcvt.s32.f32 %v118
    %v125 = vld [vmem:[%s2] sm:$0xff]
    %v126 = vld [vmem:[%s2 + $0x8] sm:$0xff]
    %v127 = vld [vmem:[%s3] sm:$0xff]
    %v128 = vld [vmem:[%s4] sm:$0x1]
    %v130 = vlaneseq
    %v131 = vshrl.u32 %v130, 7
    %v132 = vsub.s32 0, %v131
    %v133 = vrot.slane %v128, %v132
    %vm135 = vcmask 64512
    %v137 = vsel %vm135, %v125, 0
    %v140 = vsel %vm135, %v126, 0
    %142 = vmatprep.subr.mxu0 0.0
    %143 = vmatpush1.msra.mxu0 %v127
    %144 = vmatprep.subr.mxu0 0.0
    %145 = vmatpush1.msra.mxu0 0.0
    %146 = vmatprep.subr.mxu0 0.0
    %147 = vmatpush1.msra.mxu0 0.0
    %148 = vmatprep.subr.mxu0 0.0
    %149 = vmatpush1.msra.mxu0 0.0
    %150 = vmatprep.subr.mxu0 0.0
    %151 = vmatpush1.msra.mxu0 0.0
    %152 = vmatprep.subr.mxu0 0.0
    %153 = vmatpush1.msra.mxu0 0.0
    %154 = vmatprep.subr.mxu0 0.0
    %155 = vmatpush1.msra.mxu0 0.0
    %156 = vmatprep.subr.mxu0 0.0
    %157 = vmatpush1.msra.mxu0 0.0
    %158 = vmatprep.subr.mxu0 0.0
    %159 = vmatpush1.msra.mxu0 0.0
    %160 = vmatprep.subr.mxu0 0.0
    %161 = vmatpush1.msra.mxu0 0.0
    %162 = vmatprep.subr.mxu0 0.0
    %163 = vmatpush1.msra.mxu0 0.0
    %164 = vmatprep.subr.mxu0 0.0
    %165 = vmatpush1.msra.mxu0 0.0
    %166 = vmatprep.subr.mxu0 0.0
    %167 = vmatpush1.msra.mxu0 0.0
    %168 = vmatprep.subr.mxu0 0.0
    %169 = vmatpush1.msra.mxu0 0.0
    %170 = vmatprep.subr.mxu0 0.0
    %171 = vmatpush1.msra.mxu0 0.0
    %172 = vmatprep.subr.mxu0 0.0
    %173 = vmatpush1.msra.mxu0 0.0
    %174 = vmatprep.subr.mxu0 0.0
    %175 = vmatpush1.msra.mxu0 0.0
    %176 = vmatprep.subr.mxu0 0.0
    %177 = vmatpush1.msra.mxu0 0.0
    %178 = vmatprep.subr.mxu0 0.0
    %179 = vmatpush1.msra.mxu0 0.0
    %180 = vmatprep.subr.mxu0 0.0
    %181 = vmatpush1.msra.mxu0 0.0
    %182 = vmatprep.subr.mxu0 0.0
    %183 = vmatpush1.msra.mxu0 0.0
    %184 = vmatprep.subr.mxu0 0.0
    %185 = vmatpush1.msra.mxu0 0.0
    %186 = vmatprep.subr.mxu0 0.0
    %187 = vmatpush1.msra.mxu0 0.0
    %188 = vmatprep.subr.mxu0 0.0
    %189 = vmatpush1.msra.mxu0 0.0
    %190 = vmatprep.subr.mxu0 0.0
    %191 = vmatpush1.msra.mxu0 0.0
    %192 = vmatprep.subr.mxu0 0.0
    %193 = vmatpush1.msra.mxu0 0.0
    %194 = vmatprep.subr.mxu0 0.0
    %195 = vmatpush1.msra.mxu0 0.0
    %196 = vmatprep.subr.mxu0 0.0
    %197 = vmatpush1.msra.mxu0 0.0
    %198 = vmatprep.subr.mxu0 0.0
    %199 = vmatpush1.msra.mxu0 0.0
    %200 = vmatprep.subr.mxu0 0.0
    %201 = vmatpush1.msra.mxu0 0.0
    %202 = vmatprep.subr.mxu0 0.0
    %203 = vmatpush1.msra.mxu0 0.0
    %204 = vmatprep.subr.mxu0 0.0
    %205 = vmatpush1.msra.mxu0 0.0
    %206 = vmatprep.mubr.f32.mxu0 0.0
    %207 = vmatmul.mubr.f32.gmra.mrb[0].mxu0 %v137
    %v208 = vpop.f32.mrb[0].mxu0
    %v209 = vadd.f32 %v133, %v208
    %v210 = vpop.f32.mrb[0].mxu0
    %211 = vmatprep.mubr.f32.mxu0 0.0
    %212 = vmatmul.mubr.f32.gmra.mrb[0].mxu0 %v140
    %v213 = vpop.f32.mrb[0].mxu0
    %v214 = vadd.f32 %v133, %v213
    %v215 = vpop.f32.mrb[0].mxu0
    %216 = vdwg.mxu0
    %v217 = vld [vmem:[%s5] sm:$0xff]
    %v218 = vld [vmem:[%s6] sm:$0x1]
    %v220 = vlaneseq
    %v221 = vshrl.u32 %v220, 7
    %v222 = vsub.s32 0, %v221
    %v223 = vrot.slane %v218, %v222
    %225 = vmatprep.subr.mxu0 0.0
    %226 = vmatpush1.msra.mxu0 %v217
    %227 = vmatprep.subr.mxu0 0.0
    %228 = vmatpush1.msra.mxu0 0.0
    %229 = vmatprep.subr.mxu0 0.0
    %230 = vmatpush1.msra.mxu0 0.0
    %231 = vmatprep.subr.mxu0 0.0
    %232 = vmatpush1.msra.mxu0 0.0
    %233 = vmatprep.subr.mxu0 0.0
    %234 = vmatpush1.msra.mxu0 0.0
    %235 = vmatprep.subr.mxu0 0.0
    %236 = vmatpush1.msra.mxu0 0.0
    %237 = vmatprep.subr.mxu0 0.0
    %238 = vmatpush1.msra.mxu0 0.0
    %239 = vmatprep.subr.mxu0 0.0
    %240 = vmatpush1.msra.mxu0 0.0
    %241 = vmatprep.subr.mxu0 0.0
    %242 = vmatpush1.msra.mxu0 0.0
    %243 = vmatprep.subr.mxu0 0.0
    %244 = vmatpush1.msra.mxu0 0.0
    %245 = vmatprep.subr.mxu0 0.0
    %246 = vmatpush1.msra.mxu0 0.0
    %247 = vmatprep.subr.mxu0 0.0
    %248 = vmatpush1.msra.mxu0 0.0
    %249 = vmatprep.subr.mxu0 0.0
    %250 = vmatpush1.msra.mxu0 0.0
    %251 = vmatprep.subr.mxu0 0.0
    %252 = vmatpush1.msra.mxu0 0.0
    %253 = vmatprep.subr.mxu0 0.0
    %254 = vmatpush1.msra.mxu0 0.0
    %255 = vmatprep.subr.mxu0 0.0
    %256 = vmatpush1.msra.mxu0 0.0
    %257 = vmatprep.subr.mxu0 0.0
    %258 = vmatpush1.msra.mxu0 0.0
    %259 = vmatprep.subr.mxu0 0.0
    %260 = vmatpush1.msra.mxu0 0.0
    %261 = vmatprep.subr.mxu0 0.0
    %262 = vmatpush1.msra.mxu0 0.0
    %263 = vmatprep.subr.mxu0 0.0
    %264 = vmatpush1.msra.mxu0 0.0
    %265 = vmatprep.subr.mxu0 0.0
    %266 = vmatpush1.msra.mxu0 0.0
    %267 = vmatprep.subr.mxu0 0.0
    %268 = vmatpush1.msra.mxu0 0.0
    %269 = vmatprep.subr.mxu0 0.0
    %270 = vmatpush1.msra.mxu0 0.0
    %271 = vmatprep.subr.mxu0 0.0
    %272 = vmatpush1.msra.mxu0 0.0
    %273 = vmatprep.subr.mxu0 0.0
    %274 = vmatpush1.msra.mxu0 0.0
    %275 = vmatprep.subr.mxu0 0.0
    %276 = vmatpush1.msra.mxu0 0.0
    %277 = vmatprep.subr.mxu0 0.0
    %278 = vmatpush1.msra.mxu0 0.0
    %279 = vmatprep.subr.mxu0 0.0
    %280 = vmatpush1.msra.mxu0 0.0
    %281 = vmatprep.subr.mxu0 0.0
    %282 = vmatpush1.msra.mxu0 0.0
    %283 = vmatprep.subr.mxu0 0.0
    %284 = vmatpush1.msra.mxu0 0.0
    %285 = vmatprep.subr.mxu0 0.0
    %286 = vmatpush1.msra.mxu0 0.0
    %287 = vmatprep.subr.mxu0 0.0
    %288 = vmatpush1.msra.mxu0 0.0
    %289 = vmatprep.mubr.f32.mxu0 0.0
    %290 = vmatmul.mubr.f32.gmra.mrb[0].mxu0 %v137
    %v291 = vpop.f32.mrb[0].mxu0
    %v292 = vadd.f32 %v223, %v291
    %v293 = vpop.f32.mrb[0].mxu0
    %294 = vmatprep.mubr.f32.mxu0 0.0
    %295 = vmatmul.mubr.f32.gmra.mrb[0].mxu0 %v140
    %v296 = vpop.f32.mrb[0].mxu0
    %v297 = vadd.f32 %v223, %v296
    %v298 = vpop.f32.mrb[0].mxu0
    %299 = vdwg.mxu0
    %v300 = vsel %vm77, 1, 0
    %v301 = vsel %vm78, 1, 0
    %v302 = vsel %vm79, 1, 0
    %v303 = vsel %vm80, 1, 0
    %v304 = vsel %vm81, 1, 0
    %v305 = vsel %vm82, 1, 0
    %v306 = vcvt.s32.f32 %v300
    %v307 = vcvt.s32.f32 %v301
    %v308 = vcvt.s32.f32 %v302
    %v309 = vcvt.s32.f32 %v303
    %v310 = vcvt.s32.f32 %v304
    %v311 = vcvt.s32.f32 %v305
    %vm312 = vcmask 130048
    %v314 = vsel %vm312, %v306, 0
    %v317 = vsel %vm312, %v307, 0
    %v320 = vsel %vm312, %v308, 0
    %v323 = vsel %vm312, %v309, 0
    %v326 = vsel %vm312, %v310, 0
    %v329 = vsel %vm312, %v311, 0
    %331 = vmatprep.subr.mxu0 0.0
    %332 = vmatpush1.msra.mxu0 %v209
    %333 = vmatprep.subr.mxu0 0.0
    %334 = vmatpush1.msra.mxu0 %v214
    %335 = vmatprep.subr.mxu0 0.0
    %336 = vmatpush1.msra.mxu0 0.0
    %337 = vmatprep.subr.mxu0 0.0
    %338 = vmatpush1.msra.mxu0 0.0
    %339 = vmatprep.subr.mxu0 0.0
    %340 = vmatpush1.msra.mxu0 0.0
    %341 = vmatprep.subr.mxu0 0.0
    %342 = vmatpush1.msra.mxu0 0.0
    %343 = vmatprep.subr.mxu0 0.0
    %344 = vmatpush1.msra.mxu0 0.0
    %345 = vmatprep.subr.mxu0 0.0
    %346 = vmatpush1.msra.mxu0 0.0
    %347 = vmatprep.subr.mxu0 0.0
    %348 = vmatpush1.msra.mxu0 0.0
    %349 = vmatprep.subr.mxu0 0.0
    %350 = vmatpush1.msra.mxu0 0.0
    %351 = vmatprep.subr.mxu0 0.0
    %352 = vmatpush1.msra.mxu0 0.0
    %353 = vmatprep.subr.mxu0 0.0
    %354 = vmatpush1.msra.mxu0 0.0
    %355 = vmatprep.subr.mxu0 0.0
    %356 = vmatpush1.msra.mxu0 0.0
    %357 = vmatprep.subr.mxu0 0.0
    %358 = vmatpush1.msra.mxu0 0.0
    %359 = vmatprep.subr.mxu0 0.0
    %360 = vmatpush1.msra.mxu0 0.0
    %361 = vmatprep.subr.mxu0 0.0
    %362 = vmatpush1.msra.mxu0 0.0
    %363 = vmatprep.subr.mxu0 0.0
    %364 = vmatpush1.msra.mxu0 0.0
    %365 = vmatprep.subr.mxu0 0.0
    %366 = vmatpush1.msra.mxu0 0.0
    %367 = vmatprep.subr.mxu0 0.0
    %368 = vmatpush1.msra.mxu0 0.0
    %369 = vmatprep.subr.mxu0 0.0
    %370 = vmatpush1.msra.mxu0 0.0
    %371 = vmatprep.subr.mxu0 0.0
    %372 = vmatpush1.msra.mxu0 0.0
    %373 = vmatprep.subr.mxu0 0.0
    %374 = vmatpush1.msra.mxu0 0.0
    %375 = vmatprep.subr.mxu0 0.0
    %376 = vmatpush1.msra.mxu0 0.0
    %377 = vmatprep.subr.mxu0 0.0
    %378 = vmatpush1.msra.mxu0 0.0
    %379 = vmatprep.subr.mxu0 0.0
    %380 = vmatpush1.msra.mxu0 0.0
    %381 = vmatprep.subr.mxu0 0.0
    %382 = vmatpush1.msra.mxu0 0.0
    %383 = vmatprep.subr.mxu0 0.0
    %384 = vmatpush1.msra.mxu0 0.0
    %385 = vmatprep.subr.mxu0 0.0
    %386 = vmatpush1.msra.mxu0 0.0
    %387 = vmatprep.subr.mxu0 0.0
    %388 = vmatpush1.msra.mxu0 0.0
    %389 = vmatprep.subr.mxu0 0.0
    %390 = vmatpush1.msra.mxu0 0.0
    %391 = vmatprep.subr.mxu0 0.0
    %392 = vmatpush1.msra.mxu0 0.0
    %393 = vmatprep.subr.mxu0 0.0
    %394 = vmatpush1.msra.mxu0 0.0
    %395 = vmatprep.mubr.f32.mxu0 0.0
    %396 = vmatmul.mubr.f32.gmra.mrb[0].mxu0 %v314
    %v397 = vpop.f32.mrb[0].mxu0
    %v398 = vadd.f32 0.0, %v397
    %v399 = vpop.f32.mrb[0].mxu0
    %400 = vmatprep.mubr.f32.mxu0 0.0
    %401 = vmatmul.mubr.f32.gmra.mrb[0].mxu0 %v317
    %v402 = vpop.f32.mrb[0].mxu0
    %v403 = vadd.f32 0.0, %v402
    %v404 = vpop.f32.mrb[0].mxu0
    %405 = vmatprep.mubr.f32.mxu0 0.0
    %406 = vmatmul.mubr.f32.gmra.mrb[0].mxu0 %v320
    %v407 = vpop.f32.mrb[0].mxu0
    %v408 = vadd.f32 0.0, %v407
    %v409 = vpop.f32.mrb[0].mxu0
    %410 = vmatprep.mubr.f32.mxu0 0.0
    %411 = vmatmul.mubr.f32.gmra.mrb[0].mxu0 %v323
    %v412 = vpop.f32.mrb[0].mxu0
    %v413 = vadd.f32 0.0, %v412
    %v414 = vpop.f32.mrb[0].mxu0
    %415 = vmatprep.mubr.f32.mxu0 0.0
    %416 = vmatmul.mubr.f32.gmra.mrb[0].mxu0 %v326
    %v417 = vpop.f32.mrb[0].mxu0
    %v418 = vadd.f32 0.0, %v417
    %v419 = vpop.f32.mrb[0].mxu0
    %420 = vmatprep.mubr.f32.mxu0 0.0
    %421 = vmatmul.mubr.f32.gmra.mrb[0].mxu0 %v329
    %v422 = vpop.f32.mrb[0].mxu0
    %v423 = vadd.f32 0.0, %v422
    %v424 = vpop.f32.mrb[0].mxu0
    %425 = vdwg.mxu0
    %v427 = vsel %vm312, %v119, 0
    %v430 = vsel %vm312, %v120, 0
    %v433 = vsel %vm312, %v121, 0
    %v436 = vsel %vm312, %v122, 0
    %v439 = vsel %vm312, %v123, 0
    %v442 = vsel %vm312, %v124, 0
    %444 = vmatprep.subr.mxu0 0.0
    %445 = vmatpush1.msra.mxu0 %v292
    %446 = vmatprep.subr.mxu0 0.0
    %447 = vmatpush1.msra.mxu0 %v297
    %448 = vmatprep.subr.mxu0 0.0
    %449 = vmatpush1.msra.mxu0 0.0
    %450 = vmatprep.subr.mxu0 0.0
    %451 = vmatpush1.msra.mxu0 0.0
    %452 = vmatprep.subr.mxu0 0.0
    %453 = vmatpush1.msra.mxu0 0.0
    %454 = vmatprep.subr.mxu0 0.0
    %455 = vmatpush1.msra.mxu0 0.0
    %456 = vmatprep.subr.mxu0 0.0
    %457 = vmatpush1.msra.mxu0 0.0
    %458 = vmatprep.subr.mxu0 0.0
    %459 = vmatpush1.msra.mxu0 0.0
    %460 = vmatprep.subr.mxu0 0.0
    %461 = vmatpush1.msra.mxu0 0.0
    %462 = vmatprep.subr.mxu0 0.0
    %463 = vmatpush1.msra.mxu0 0.0
    %464 = vmatprep.subr.mxu0 0.0
    %465 = vmatpush1.msra.mxu0 0.0
    %466 = vmatprep.subr.mxu0 0.0
    %467 = vmatpush1.msra.mxu0 0.0
    %468 = vmatprep.subr.mxu0 0.0
    %469 = vmatpush1.msra.mxu0 0.0
    %470 = vmatprep.subr.mxu0 0.0
    %471 = vmatpush1.msra.mxu0 0.0
    %472 = vmatprep.subr.mxu0 0.0
    %473 = vmatpush1.msra.mxu0 0.0
    %474 = vmatprep.subr.mxu0 0.0
    %475 = vmatpush1.msra.mxu0 0.0
    %476 = vmatprep.subr.mxu0 0.0
    %477 = vmatpush1.msra.mxu0 0.0
    %478 = vmatprep.subr.mxu0 0.0
    %479 = vmatpush1.msra.mxu0 0.0
    %480 = vmatprep.subr.mxu0 0.0
    %481 = vmatpush1.msra.mxu0 0.0
    %482 = vmatprep.subr.mxu0 0.0
    %483 = vmatpush1.msra.mxu0 0.0
    %484 = vmatprep.subr.mxu0 0.0
    %485 = vmatpush1.msra.mxu0 0.0
    %486 = vmatprep.subr.mxu0 0.0
    %487 = vmatpush1.msra.mxu0 0.0
    %488 = vmatprep.subr.mxu0 0.0
    %489 = vmatpush1.msra.mxu0 0.0
    %490 = vmatprep.subr.mxu0 0.0
    %491 = vmatpush1.msra.mxu0 0.0
    %492 = vmatprep.subr.mxu0 0.0
    %493 = vmatpush1.msra.mxu0 0.0
    %494 = vmatprep.subr.mxu0 0.0
    %495 = vmatpush1.msra.mxu0 0.0
    %496 = vmatprep.subr.mxu0 0.0
    %497 = vmatpush1.msra.mxu0 0.0
    %498 = vmatprep.subr.mxu0 0.0
    %499 = vmatpush1.msra.mxu0 0.0
    %500 = vmatprep.subr.mxu0 0.0
    %501 = vmatpush1.msra.mxu0 0.0
    %502 = vmatprep.subr.mxu0 0.0
    %503 = vmatpush1.msra.mxu0 0.0
    %504 = vmatprep.subr.mxu0 0.0
    %505 = vmatpush1.msra.mxu0 0.0
    %506 = vmatprep.subr.mxu0 0.0
    %507 = vmatpush1.msra.mxu0 0.0
    %508 = vmatprep.mubr.f32.mxu0 0.0
    %509 = vmatmul.mubr.f32.gmra.mrb[0].mxu0 %v427
    %v510 = vpop.f32.mrb[0].mxu0
    %v511 = vadd.f32 0.0, %v510
    %v512 = vpop.f32.mrb[0].mxu0
    %513 = vmatprep.mubr.f32.mxu0 0.0
    %514 = vmatmul.mubr.f32.gmra.mrb[0].mxu0 %v430
    %v515 = vpop.f32.mrb[0].mxu0
    %v516 = vadd.f32 0.0, %v515
    %v517 = vpop.f32.mrb[0].mxu0
    %518 = vmatprep.mubr.f32.mxu0 0.0
    %519 = vmatmul.mubr.f32.gmra.mrb[0].mxu0 %v433
    %v520 = vpop.f32.mrb[0].mxu0
    %v521 = vadd.f32 0.0, %v520
    %v522 = vpop.f32.mrb[0].mxu0
    %523 = vmatprep.mubr.f32.mxu0 0.0
    %524 = vmatmul.mubr.f32.gmra.mrb[0].mxu0 %v436
    %v525 = vpop.f32.mrb[0].mxu0
    %v526 = vadd.f32 0.0, %v525
    %v527 = vpop.f32.mrb[0].mxu0
    %528 = vmatprep.mubr.f32.mxu0 0.0
    %529 = vmatmul.mubr.f32.gmra.mrb[0].mxu0 %v439
    %v530 = vpop.f32.mrb[0].mxu0
    %v531 = vadd.f32 0.0, %v530
    %v532 = vpop.f32.mrb[0].mxu0
    %533 = vmatprep.mubr.f32.mxu0 0.0
    %534 = vmatmul.mubr.f32.gmra.mrb[0].mxu0 %v442
    %v535 = vpop.f32.mrb[0].mxu0
    %v536 = vadd.f32 0.0, %v535
    %v537 = vpop.f32.mrb[0].mxu0
    %538 = vdwg.mxu0
    %v539 = vadd.f32 %v398, %v511
    %v540 = vadd.f32 %v403, %v516
    %v541 = vadd.f32 %v408, %v521
    %v542 = vadd.f32 %v413, %v526
    %v543 = vadd.f32 %v418, %v531
    %v544 = vadd.f32 %v423, %v536
    %vm545 = vcmp.gt.f32.partialorder %v539, 0.0
    %vm546 = vcmp.gt.f32.partialorder %v540, 0.0
    %vm547 = vcmp.gt.f32.partialorder %v541, 0.0
    %vm548 = vcmp.gt.f32.partialorder %v542, 0.0
    %vm549 = vcmp.gt.f32.partialorder %v543, 0.0
    %vm550 = vcmp.gt.f32.partialorder %v544, 0.0
    %v551 = vmul.f32 %v539, 0.2
    %v552 = vmul.f32 %v540, 0.2
    %v553 = vmul.f32 %v541, 0.2
    %v554 = vmul.f32 %v542, 0.2
    %v555 = vmul.f32 %v543, 0.2
    %v556 = vmul.f32 %v544, 0.2
    %v557 = vsel %vm545, %v539, %v551
    %v558 = vsel %vm546, %v540, %v552
    %v559 = vsel %vm547, %v541, %v553
    %v560 = vsel %vm548, %v542, %v554
    %v561 = vsel %vm549, %v543, %v555
    %v562 = vsel %vm550, %v544, %v556
    %v563 = vld [vmem:[%s7] sm:$0x1]
    %v565 = vlaneseq
    %v566 = vshrl.u32 %v565, 7
    %v567 = vsub.s32 0, %v566
    %v568 = vrot.slane %v563, %v567
    %v570 = vmul.f32 %v557, %v568
    %v571 = vmul.f32 %v558, %v568
    %v572 = vmul.f32 %v559, %v568
    %v573 = vmul.f32 %v560, %v568
    %v574 = vmul.f32 %v561, %v568
    %v575 = vmul.f32 %v562, %v568
    %vm576 = vcmask 261120
    %v577 = vsel %vm576, %v570, 0.0
    %578 = vadd.xlane.f32.xlu0 %v577
    %v579 = vpop.xlane.xlu0 %578
    %v580 = vsel %vm576, %v571, 0.0
    %581 = vadd.xlane.f32.xlu0 %v580
    %v582 = vpop.xlane.xlu0 %581
    %v583 = vsel %vm576, %v572, 0.0
    %584 = vadd.xlane.f32.xlu0 %v583
    %v585 = vpop.xlane.xlu0 %584
    %v586 = vsel %vm576, %v573, 0.0
    %587 = vadd.xlane.f32.xlu0 %v586
    %v588 = vpop.xlane.xlu0 %587
    %v589 = vsel %vm576, %v574, 0.0
    %590 = vadd.xlane.f32.xlu0 %v589
    %v591 = vpop.xlane.xlu0 %590
    %v592 = vsel %vm576, %v575, 0.0
    %593 = vadd.xlane.f32.xlu0 %v592
    %v594 = vpop.xlane.xlu0 %593
    %v595 = vsel %vm107, %v579, -1e+30
    %v596 = vsel %vm108, %v582, -1e+30
    %v597 = vsel %vm109, %v585, -1e+30
    %v598 = vsel %vm110, %v588, -1e+30
    %v599 = vsel %vm111, %v591, -1e+30
    %v600 = vsel %vm112, %v594, -1e+30
    %v601 = vsel %vm312, %v595, -inf
    %v602 = vsel %vm312, %v596, -inf
    %v603 = vsel %vm312, %v597, -inf
    %v604 = vsel %vm312, %v598, -inf
    %v605 = vsel %vm312, %v599, -inf
    %v606 = vmax.f32 %v601, %v605
    %v607 = vsel %vm312, %v600, -inf
    %v608 = vmax.f32 %v602, %v607
    %v609 = vmax.f32 %v606, %v608
    %v610 = vmax.f32 %v603, %v604
    %v611 = vmax.f32 %v609, %v610
    %v612 = vrot.slane %v611, 4
    %v613 = vmax.f32 %v611, %v612
    %v614 = vrot.slane %v613, 2
    %v615 = vmax.f32 %v613, %v614
    %v616 = vrot.slane %v615, 1
    %v617 = vmax.f32 %v615, %v616
    %v618 = vsel %vm107, %v617, 0.0
    %v619 = vsel %vm108, %v617, 0.0
    %v620 = vsel %vm109, %v617, 0.0
    %v621 = vsel %vm110, %v617, 0.0
    %v622 = vsel %vm111, %v617, 0.0
    %v623 = vsel %vm112, %v617, 0.0
    %v624 = vsel %vm312, %v618, 0.0
    %625 = vadd.xlane.f32.xlu0 %v624
    %v626 = vpop.xlane.xlu0 %625
    %v627 = vsel %vm312, %v619, 0.0
    %628 = vadd.xlane.f32.xlu0 %v627
    %v629 = vpop.xlane.xlu0 %628
    %v630 = vsel %vm312, %v620, 0.0
    %631 = vadd.xlane.f32.xlu0 %v630
    %v632 = vpop.xlane.xlu0 %631
    %v633 = vsel %vm312, %v621, 0.0
    %634 = vadd.xlane.f32.xlu0 %v633
    %v635 = vpop.xlane.xlu0 %634
    %v636 = vsel %vm312, %v622, 0.0
    %637 = vadd.xlane.f32.xlu0 %v636
    %v638 = vpop.xlane.xlu0 %637
    %v639 = vsel %vm312, %v623, 0.0
    %640 = vadd.xlane.f32.xlu0 %v639
    %v641 = vpop.xlane.xlu0 %640
    %v642 = vsub.f32 %v579, %v626
    %v643 = vsub.f32 %v582, %v629
    %v644 = vsub.f32 %v585, %v632
    %v645 = vsub.f32 %v588, %v635
    %v646 = vsub.f32 %v591, %v638
    %v647 = vsub.f32 %v594, %v641
    %v648 = vmul.f32 %v642, 1.442695
    %v649 = vpow.pop %v648
    %v650 = vmul.f32 %v643, 1.442695
    %v651 = vpow.pop %v650
    %v652 = vmul.f32 %v644, 1.442695
    %v653 = vpow.pop %v652
    %v654 = vmul.f32 %v645, 1.442695
    %v655 = vpow.pop %v654
    %v656 = vmul.f32 %v646, 1.442695
    %v657 = vpow.pop %v656
    %v658 = vmul.f32 %v647, 1.442695
    %v659 = vpow.pop %v658
    %v660 = vmul.f32 %v649, %v398
    %v661 = vmul.f32 %v651, %v403
    %v662 = vmul.f32 %v653, %v408
    %v663 = vmul.f32 %v655, %v413
    %v664 = vmul.f32 %v657, %v418
    %v665 = vmul.f32 %v659, %v423
    %666 = vxpose.xlu0.b32.start [1/16] %v119, 128
    %667 = vxpose.xlu0.b32.cont [2/16] %v120, 128
    %668 = vxpose.xlu0.b32.cont [3/16] %v121, 128
    %669 = vxpose.xlu0.b32.cont [4/16] %v122, 128
    %670 = vxpose.xlu0.b32.cont [5/16] %v123, 128
    %671 = vxpose.xlu0.b32.cont [6/16] %v124, 128
    %672 = vxpose.xlu0.b32.cont [7/16] 0.0, 128
    %673 = vxpose.xlu0.b32.cont [8/16] 0.0, 128
    %674 = vxpose.xlu0.b32.cont [9/16] 0.0, 128
    %675 = vxpose.xlu0.b32.cont [10/16] 0.0, 128
    %676 = vxpose.xlu0.b32.cont [11/16] 0.0, 128
    %677 = vxpose.xlu0.b32.cont [12/16] 0.0, 128
    %678 = vxpose.xlu0.b32.cont [13/16] 0.0, 128
    %679 = vxpose.xlu0.b32.cont [14/16] 0.0, 128
    %680 = vxpose.xlu0.b32.cont [15/16] 0.0, 128
    %681 = vxpose.xlu0.b32.end [16/16] 0.0, 128
    %v682 = vpop.trf.xlu0
    %v683 = vpop.trf.xlu0
    %v684 = vpop.trf.xlu0
    %v685 = vpop.trf.xlu0
    %v686 = vpop.trf.xlu0
    %v687 = vpop.trf.xlu0
    %v688 = vpop.trf.xlu0
    %v689 = vpop.trf.xlu0
    %v690 = vpop.trf.xlu0
    %v691 = vpop.trf.xlu0
    %v692 = vpop.trf.xlu0
    %v693 = vpop.trf.xlu0
    %v694 = vpop.trf.xlu0
    %v695 = vpop.trf.xlu0
    %v696 = vpop.trf.xlu0
    %v697 = vpop.trf.xlu0
    %vm698 = vcmask 392192
    %v700 = vsel %vm698, %v682, 0
    %v703 = vsel %vm698, %v683, 0
    %705 = vmatprep.subr.mxu0 0.0
    %706 = vmatpush1.msra.mxu0 %v660
    %707 = vmatprep.subr.mxu0 0.0
    %708 = vmatpush1.msra.mxu0 %v661
    %709 = vmatprep.subr.mxu0 0.0
    %710 = vmatpush1.msra.mxu0 %v662
    %711 = vmatprep.subr.mxu0 0.0
    %712 = vmatpush1.msra.mxu0 %v663
    %713 = vmatprep.subr.mxu0 0.0
    %714 = vmatpush1.msra.mxu0 %v664
    %715 = vmatprep.subr.mxu0 0.0
    %716 = vmatpush1.msra.mxu0 %v665
    %717 = vmatprep.subr.mxu0 0.0
    %718 = vmatpush1.msra.mxu0 0.0
    %719 = vmatprep.subr.mxu0 0.0
    %720 = vmatpush1.msra.mxu0 0.0
    %721 = vmatprep.subr.mxu0 0.0
    %722 = vmatpush1.msra.mxu0 0.0
    %723 = vmatprep.subr.mxu0 0.0
    %724 = vmatpush1.msra.mxu0 0.0
    %725 = vmatprep.subr.mxu0 0.0
    %726 = vmatpush1.msra.mxu0 0.0
    %727 = vmatprep.subr.mxu0 0.0
    %728 = vmatpush1.msra.mxu0 0.0
    %729 = vmatprep.subr.mxu0 0.0
    %730 = vmatpush1.msra.mxu0 0.0
    %731 = vmatprep.subr.mxu0 0.0
    %732 = vmatpush1.msra.mxu0 0.0
    %733 = vmatprep.subr.mxu0 0.0
    %734 = vmatpush1.msra.mxu0 0.0
    %735 = vmatprep.subr.mxu0 0.0
    %736 = vmatpush1.msra.mxu0 0.0
    %737 = vmatprep.subr.mxu0 0.0
    %738 = vmatpush1.msra.mxu0 0.0
    %739 = vmatprep.subr.mxu0 0.0
    %740 = vmatpush1.msra.mxu0 0.0
    %741 = vmatprep.subr.mxu0 0.0
    %742 = vmatpush1.msra.mxu0 0.0
    %743 = vmatprep.subr.mxu0 0.0
    %744 = vmatpush1.msra.mxu0 0.0
    %745 = vmatprep.subr.mxu0 0.0
    %746 = vmatpush1.msra.mxu0 0.0
    %747 = vmatprep.subr.mxu0 0.0
    %748 = vmatpush1.msra.mxu0 0.0
    %749 = vmatprep.subr.mxu0 0.0
    %750 = vmatpush1.msra.mxu0 0.0
    %751 = vmatprep.subr.mxu0 0.0
    %752 = vmatpush1.msra.mxu0 0.0
    %753 = vmatprep.subr.mxu0 0.0
    %754 = vmatpush1.msra.mxu0 0.0
    %755 = vmatprep.subr.mxu0 0.0
    %756 = vmatpush1.msra.mxu0 0.0
    %757 = vmatprep.subr.mxu0 0.0
    %758 = vmatpush1.msra.mxu0 0.0
    %759 = vmatprep.subr.mxu0 0.0
    %760 = vmatpush1.msra.mxu0 0.0
    %761 = vmatprep.subr.mxu0 0.0
    %762 = vmatpush1.msra.mxu0 0.0
    %763 = vmatprep.subr.mxu0 0.0
    %764 = vmatpush1.msra.mxu0 0.0
    %765 = vmatprep.subr.mxu0 0.0
    %766 = vmatpush1.msra.mxu0 0.0
    %767 = vmatprep.subr.mxu0 0.0
    %768 = vmatpush1.msra.mxu0 0.0
    %769 = vmatprep.mubr.f32.mxu0 0.0
    %770 = vmatmul.mubr.f32.gmra.mrb[0].mxu0 %v700
    %v771 = vpop.f32.mrb[0].mxu0
    %v772 = vadd.f32 0.0, %v771
    %v773 = vpop.f32.mrb[0].mxu0
    %774 = vmatprep.mubr.f32.mxu0 0.0
    %775 = vmatmul.mubr.f32.gmra.mrb[0].mxu0 %v703
    %v776 = vpop.f32.mrb[0].mxu0
    %v777 = vadd.f32 0.0, %v776
    %v778 = vpop.f32.mrb[0].mxu0
    %779 = vdwg.mxu0
    %vm780 = vcmp.gt.f32.partialorder %v772, 0.0
    %vm781 = vcmp.gt.f32.partialorder %v777, 0.0
    %v782 = vsel %vm780, %v772, 1.0
    %v783 = vsel %vm781, %v777, 1.0
    %v784 = vrcp.pop %v782
    %v785 = vrcp.pop %v783
    %787 = vset.pattern.permute.xlu0 32
    %788 = vperm.xlu0 %787, %v784
    %v789 = vpop.permute.xlu0 %788
    %792 = vset.pattern.permute.xlu0 32
    %793 = vperm.xlu0 %792, %v785
    %v794 = vpop.permute.xlu0 %793
    %v796 = vmul.f32 %v772, %v789
    %v797 = vmul.f32 %v777, %v794
    %v798 = vsel %vm780, 1, 0
    %v799 = vsel %vm781, 1, 0
    %800 = vset.pattern.permute.xlu0 32
    %801 = vperm.xlu0 %800, %v798
    %v802 = vpop.permute.xlu0 %801
    %803 = vset.pattern.permute.xlu0 32
    %804 = vperm.xlu0 %803, %v799
    %v805 = vpop.permute.xlu0 %804
    %vm806 = vcmp.eq.s32.totalorder %v802, 1
    %vm807 = vcmp.eq.s32.totalorder %v805, 1
    %v808 = vsel %vm806, %v796, 0.0
    %v809 = vsel %vm807, %v797, 0.0
    %v810 = vld [vmem:[%s8] sm:$0x1]
    %v812 = vlaneseq
    %v813 = vshrl.u32 %v812, 7
    %v814 = vsub.s32 0, %v813
    %v815 = vrot.slane %v810, %v814
    %v817 = vadd.f32 %v808, %v815
    %v818 = vadd.f32 %v809, %v815
    %v819 = vmax.f32 %v817, 0.0
    %v820 = vmax.f32 %v818, 0.0
    %v821 = vld [vmem:[%s9] sm:$0xff]
    %v822 = vld [vmem:[%s9 + $0x8] sm:$0xff]
    %v823 = vld [vmem:[%s9 + $0x10] sm:$0xff]
    %v824 = vld [vmem:[%s9 + $0x18] sm:$0xff]
    %v825 = vld [vmem:[%s10] sm:$0x1]
    %v827 = vlaneseq
    %v828 = vshrl.u32 %v827, 7
    %v829 = vsub.s32 0, %v828
    %v830 = vrot.slane %v825, %v829
    %v833 = vsel %vm576, %v819, 0
    %v836 = vsel %vm576, %v820, 0
    %838 = vmatprep.subr.mxu0 0.0
    %839 = vmatpush1.msra.mxu0 %v821
    %840 = vmatprep.subr.mxu0 0.0
    %841 = vmatpush1.msra.mxu0 %v822
    %842 = vmatprep.subr.mxu0 0.0
    %843 = vmatpush1.msra.mxu0 %v823
    %844 = vmatprep.subr.mxu0 0.0
    %845 = vmatpush1.msra.mxu0 %v824
    %846 = vmatprep.subr.mxu0 0.0
    %847 = vmatpush1.msra.mxu0 0.0
    %848 = vmatprep.subr.mxu0 0.0
    %849 = vmatpush1.msra.mxu0 0.0
    %850 = vmatprep.subr.mxu0 0.0
    %851 = vmatpush1.msra.mxu0 0.0
    %852 = vmatprep.subr.mxu0 0.0
    %853 = vmatpush1.msra.mxu0 0.0
    %854 = vmatprep.subr.mxu0 0.0
    %855 = vmatpush1.msra.mxu0 0.0
    %856 = vmatprep.subr.mxu0 0.0
    %857 = vmatpush1.msra.mxu0 0.0
    %858 = vmatprep.subr.mxu0 0.0
    %859 = vmatpush1.msra.mxu0 0.0
    %860 = vmatprep.subr.mxu0 0.0
    %861 = vmatpush1.msra.mxu0 0.0
    %862 = vmatprep.subr.mxu0 0.0
    %863 = vmatpush1.msra.mxu0 0.0
    %864 = vmatprep.subr.mxu0 0.0
    %865 = vmatpush1.msra.mxu0 0.0
    %866 = vmatprep.subr.mxu0 0.0
    %867 = vmatpush1.msra.mxu0 0.0
    %868 = vmatprep.subr.mxu0 0.0
    %869 = vmatpush1.msra.mxu0 0.0
    %870 = vmatprep.subr.mxu0 0.0
    %871 = vmatpush1.msra.mxu0 0.0
    %872 = vmatprep.subr.mxu0 0.0
    %873 = vmatpush1.msra.mxu0 0.0
    %874 = vmatprep.subr.mxu0 0.0
    %875 = vmatpush1.msra.mxu0 0.0
    %876 = vmatprep.subr.mxu0 0.0
    %877 = vmatpush1.msra.mxu0 0.0
    %878 = vmatprep.subr.mxu0 0.0
    %879 = vmatpush1.msra.mxu0 0.0
    %880 = vmatprep.subr.mxu0 0.0
    %881 = vmatpush1.msra.mxu0 0.0
    %882 = vmatprep.subr.mxu0 0.0
    %883 = vmatpush1.msra.mxu0 0.0
    %884 = vmatprep.subr.mxu0 0.0
    %885 = vmatpush1.msra.mxu0 0.0
    %886 = vmatprep.subr.mxu0 0.0
    %887 = vmatpush1.msra.mxu0 0.0
    %888 = vmatprep.subr.mxu0 0.0
    %889 = vmatpush1.msra.mxu0 0.0
    %890 = vmatprep.subr.mxu0 0.0
    %891 = vmatpush1.msra.mxu0 0.0
    %892 = vmatprep.subr.mxu0 0.0
    %893 = vmatpush1.msra.mxu0 0.0
    %894 = vmatprep.subr.mxu0 0.0
    %895 = vmatpush1.msra.mxu0 0.0
    %896 = vmatprep.subr.mxu0 0.0
    %897 = vmatpush1.msra.mxu0 0.0
    %898 = vmatprep.subr.mxu0 0.0
    %899 = vmatpush1.msra.mxu0 0.0
    %900 = vmatprep.subr.mxu0 0.0
    %901 = vmatpush1.msra.mxu0 0.0
    %902 = vmatprep.mubr.f32.mxu0 0.0
    %903 = vmatmul.mubr.f32.gmra.mrb[0].mxu0 %v833
    %v904 = vpop.f32.mrb[0].mxu0
    %v905 = vadd.f32 %v830, %v904
    %v906 = vpop.f32.mrb[0].mxu0
    %907 = vmatprep.mubr.f32.mxu0 0.0
    %908 = vmatmul.mubr.f32.gmra.mrb[0].mxu0 %v836
    %v909 = vpop.f32.mrb[0].mxu0
    %v910 = vadd.f32 %v830, %v909
    %v911 = vpop.f32.mrb[0].mxu0
    %912 = vdwg.mxu0
    %v913 = vld [vmem:[%s11] sm:$0xff]
    %v914 = vld [vmem:[%s11 + $0x8] sm:$0xff]
    %v915 = vld [vmem:[%s11 + $0x10] sm:$0xff]
    %v916 = vld [vmem:[%s11 + $0x18] sm:$0xff]
    %v917 = vld [vmem:[%s12] sm:$0x1]
    %v919 = vlaneseq
    %v920 = vshrl.u32 %v919, 7
    %v921 = vsub.s32 0, %v920
    %v922 = vrot.slane %v917, %v921
    %924 = vmatprep.subr.mxu0 0.0
    %925 = vmatpush1.msra.mxu0 %v913
    %926 = vmatprep.subr.mxu0 0.0
    %927 = vmatpush1.msra.mxu0 %v914
    %928 = vmatprep.subr.mxu0 0.0
    %929 = vmatpush1.msra.mxu0 %v915
    %930 = vmatprep.subr.mxu0 0.0
    %931 = vmatpush1.msra.mxu0 %v916
    %932 = vmatprep.subr.mxu0 0.0
    %933 = vmatpush1.msra.mxu0 0.0
    %934 = vmatprep.subr.mxu0 0.0
    %935 = vmatpush1.msra.mxu0 0.0
    %936 = vmatprep.subr.mxu0 0.0
    %937 = vmatpush1.msra.mxu0 0.0
    %938 = vmatprep.subr.mxu0 0.0
    %939 = vmatpush1.msra.mxu0 0.0
    %940 = vmatprep.subr.mxu0 0.0
    %941 = vmatpush1.msra.mxu0 0.0
    %942 = vmatprep.subr.mxu0 0.0
    %943 = vmatpush1.msra.mxu0 0.0
    %944 = vmatprep.subr.mxu0 0.0
    %945 = vmatpush1.msra.mxu0 0.0
    %946 = vmatprep.subr.mxu0 0.0
    %947 = vmatpush1.msra.mxu0 0.0
    %948 = vmatprep.subr.mxu0 0.0
    %949 = vmatpush1.msra.mxu0 0.0
    %950 = vmatprep.subr.mxu0 0.0
    %951 = vmatpush1.msra.mxu0 0.0
    %952 = vmatprep.subr.mxu0 0.0
    %953 = vmatpush1.msra.mxu0 0.0
    %954 = vmatprep.subr.mxu0 0.0
    %955 = vmatpush1.msra.mxu0 0.0
    %956 = vmatprep.subr.mxu0 0.0
    %957 = vmatpush1.msra.mxu0 0.0
    %958 = vmatprep.subr.mxu0 0.0
    %959 = vmatpush1.msra.mxu0 0.0
    %960 = vmatprep.subr.mxu0 0.0
    %961 = vmatpush1.msra.mxu0 0.0
    %962 = vmatprep.subr.mxu0 0.0
    %963 = vmatpush1.msra.mxu0 0.0
    %964 = vmatprep.subr.mxu0 0.0
    %965 = vmatpush1.msra.mxu0 0.0
    %966 = vmatprep.subr.mxu0 0.0
    %967 = vmatpush1.msra.mxu0 0.0
    %968 = vmatprep.subr.mxu0 0.0
    %969 = vmatpush1.msra.mxu0 0.0
    %970 = vmatprep.subr.mxu0 0.0
    %971 = vmatpush1.msra.mxu0 0.0
    %972 = vmatprep.subr.mxu0 0.0
    %973 = vmatpush1.msra.mxu0 0.0
    %974 = vmatprep.subr.mxu0 0.0
    %975 = vmatpush1.msra.mxu0 0.0
    %976 = vmatprep.subr.mxu0 0.0
    %977 = vmatpush1.msra.mxu0 0.0
    %978 = vmatprep.subr.mxu0 0.0
    %979 = vmatpush1.msra.mxu0 0.0
    %980 = vmatprep.subr.mxu0 0.0
    %981 = vmatpush1.msra.mxu0 0.0
    %982 = vmatprep.subr.mxu0 0.0
    %983 = vmatpush1.msra.mxu0 0.0
    %984 = vmatprep.subr.mxu0 0.0
    %985 = vmatpush1.msra.mxu0 0.0
    %986 = vmatprep.subr.mxu0 0.0
    %987 = vmatpush1.msra.mxu0 0.0
    %988 = vmatprep.mubr.f32.mxu0 0.0
    %989 = vmatmul.mubr.f32.gmra.mrb[0].mxu0 %v833
    %v990 = vpop.f32.mrb[0].mxu0
    %v991 = vadd.f32 %v922, %v990
    %v992 = vpop.f32.mrb[0].mxu0
    %993 = vmatprep.mubr.f32.mxu0 0.0
    %994 = vmatmul.mubr.f32.gmra.mrb[0].mxu0 %v836
    %v995 = vpop.f32.mrb[0].mxu0
    %v996 = vadd.f32 %v922, %v995
    %v997 = vpop.f32.mrb[0].mxu0
    %998 = vdwg.mxu0
    %999 = vmatprep.subr.mxu0 0.0
    %1000 = vmatpush1.msra.mxu0 %v905
    %1001 = vmatprep.subr.mxu0 0.0
    %1002 = vmatpush1.msra.mxu0 %v910
    %1003 = vmatprep.subr.mxu0 0.0
    %1004 = vmatpush1.msra.mxu0 0.0
    %1005 = vmatprep.subr.mxu0 0.0
    %1006 = vmatpush1.msra.mxu0 0.0
    %1007 = vmatprep.subr.mxu0 0.0
    %1008 = vmatpush1.msra.mxu0 0.0
    %1009 = vmatprep.subr.mxu0 0.0
    %1010 = vmatpush1.msra.mxu0 0.0
    %1011 = vmatprep.subr.mxu0 0.0
    %1012 = vmatpush1.msra.mxu0 0.0
    %1013 = vmatprep.subr.mxu0 0.0
    %1014 = vmatpush1.msra.mxu0 0.0
    %1015 = vmatprep.subr.mxu0 0.0
    %1016 = vmatpush1.msra.mxu0 0.0
    %1017 = vmatprep.subr.mxu0 0.0
    %1018 = vmatpush1.msra.mxu0 0.0
    %1019 = vmatprep.subr.mxu0 0.0
    %1020 = vmatpush1.msra.mxu0 0.0
    %1021 = vmatprep.subr.mxu0 0.0
    %1022 = vmatpush1.msra.mxu0 0.0
    %1023 = vmatprep.subr.mxu0 0.0
    %1024 = vmatpush1.msra.mxu0 0.0
    %1025 = vmatprep.subr.mxu0 0.0
    %1026 = vmatpush1.msra.mxu0 0.0
    %1027 = vmatprep.subr.mxu0 0.0
    %1028 = vmatpush1.msra.mxu0 0.0
    %1029 = vmatprep.subr.mxu0 0.0
    %1030 = vmatpush1.msra.mxu0 0.0
    %1031 = vmatprep.subr.mxu0 0.0
    %1032 = vmatpush1.msra.mxu0 0.0
    %1033 = vmatprep.subr.mxu0 0.0
    %1034 = vmatpush1.msra.mxu0 0.0
    %1035 = vmatprep.subr.mxu0 0.0
    %1036 = vmatpush1.msra.mxu0 0.0
    %1037 = vmatprep.subr.mxu0 0.0
    %1038 = vmatpush1.msra.mxu0 0.0
    %1039 = vmatprep.subr.mxu0 0.0
    %1040 = vmatpush1.msra.mxu0 0.0
    %1041 = vmatprep.subr.mxu0 0.0
    %1042 = vmatpush1.msra.mxu0 0.0
    %1043 = vmatprep.subr.mxu0 0.0
    %1044 = vmatpush1.msra.mxu0 0.0
    %1045 = vmatprep.subr.mxu0 0.0
    %1046 = vmatpush1.msra.mxu0 0.0
    %1047 = vmatprep.subr.mxu0 0.0
    %1048 = vmatpush1.msra.mxu0 0.0
    %1049 = vmatprep.subr.mxu0 0.0
    %1050 = vmatpush1.msra.mxu0 0.0
    %1051 = vmatprep.subr.mxu0 0.0
    %1052 = vmatpush1.msra.mxu0 0.0
    %1053 = vmatprep.subr.mxu0 0.0
    %1054 = vmatpush1.msra.mxu0 0.0
    %1055 = vmatprep.subr.mxu0 0.0
    %1056 = vmatpush1.msra.mxu0 0.0
    %1057 = vmatprep.subr.mxu0 0.0
    %1058 = vmatpush1.msra.mxu0 0.0
    %1059 = vmatprep.subr.mxu0 0.0
    %1060 = vmatpush1.msra.mxu0 0.0
    %1061 = vmatprep.subr.mxu0 0.0
    %1062 = vmatpush1.msra.mxu0 0.0
    %1063 = vmatprep.mubr.f32.mxu0 0.0
    %1064 = vmatmul.mubr.f32.gmra.mrb[0].mxu0 %v314
    %v1065 = vpop.f32.mrb[0].mxu0
    %v1066 = vadd.f32 0.0, %v1065
    %v1067 = vpop.f32.mrb[0].mxu0
    %1068 = vmatprep.mubr.f32.mxu0 0.0
    %1069 = vmatmul.mubr.f32.gmra.mrb[0].mxu0 %v317
    %v1070 = vpop.f32.mrb[0].mxu0
    %v1071 = vadd.f32 0.0, %v1070
    %v1072 = vpop.f32.mrb[0].mxu0
    %1073 = vmatprep.mubr.f32.mxu0 0.0
    %1074 = vmatmul.mubr.f32.gmra.mrb[0].mxu0 %v320
    %v1075 = vpop.f32.mrb[0].mxu0
    %v1076 = vadd.f32 0.0, %v1075
    %v1077 = vpop.f32.mrb[0].mxu0
    %1078 = vmatprep.mubr.f32.mxu0 0.0
    %1079 = vmatmul.mubr.f32.gmra.mrb[0].mxu0 %v323
    %v1080 = vpop.f32.mrb[0].mxu0
    %v1081 = vadd.f32 0.0, %v1080
    %v1082 = vpop.f32.mrb[0].mxu0
    %1083 = vmatprep.mubr.f32.mxu0 0.0
    %1084 = vmatmul.mubr.f32.gmra.mrb[0].mxu0 %v326
    %v1085 = vpop.f32.mrb[0].mxu0
    %v1086 = vadd.f32 0.0, %v1085
    %v1087 = vpop.f32.mrb[0].mxu0
    %1088 = vmatprep.mubr.f32.mxu0 0.0
    %1089 = vmatmul.mubr.f32.gmra.mrb[0].mxu0 %v329
    %v1090 = vpop.f32.mrb[0].mxu0
    %v1091 = vadd.f32 0.0, %v1090
    %v1092 = vpop.f32.mrb[0].mxu0
    %1093 = vdwg.mxu0
    %1094 = vmatprep.subr.mxu0 0.0
    %1095 = vmatpush1.msra.mxu0 %v991
    %1096 = vmatprep.subr.mxu0 0.0
    %1097 = vmatpush1.msra.mxu0 %v996
    %1098 = vmatprep.subr.mxu0 0.0
    %1099 = vmatpush1.msra.mxu0 0.0
    %1100 = vmatprep.subr.mxu0 0.0
    %1101 = vmatpush1.msra.mxu0 0.0
    %1102 = vmatprep.subr.mxu0 0.0
    %1103 = vmatpush1.msra.mxu0 0.0
    %1104 = vmatprep.subr.mxu0 0.0
    %1105 = vmatpush1.msra.mxu0 0.0
    %1106 = vmatprep.subr.mxu0 0.0
    %1107 = vmatpush1.msra.mxu0 0.0
    %1108 = vmatprep.subr.mxu0 0.0
    %1109 = vmatpush1.msra.mxu0 0.0
    %1110 = vmatprep.subr.mxu0 0.0
    %1111 = vmatpush1.msra.mxu0 0.0
    %1112 = vmatprep.subr.mxu0 0.0
    %1113 = vmatpush1.msra.mxu0 0.0
    %1114 = vmatprep.subr.mxu0 0.0
    %1115 = vmatpush1.msra.mxu0 0.0
    %1116 = vmatprep.subr.mxu0 0.0
    %1117 = vmatpush1.msra.mxu0 0.0
    %1118 = vmatprep.subr.mxu0 0.0
    %1119 = vmatpush1.msra.mxu0 0.0
    %1120 = vmatprep.subr.mxu0 0.0
    %1121 = vmatpush1.msra.mxu0 0.0
    %1122 = vmatprep.subr.mxu0 0.0
    %1123 = vmatpush1.msra.mxu0 0.0
    %1124 = vmatprep.subr.mxu0 0.0
    %1125 = vmatpush1.msra.mxu0 0.0
    %1126 = vmatprep.subr.mxu0 0.0
    %1127 = vmatpush1.msra.mxu0 0.0
    %1128 = vmatprep.subr.mxu0 0.0
    %1129 = vmatpush1.msra.mxu0 0.0
    %1130 = vmatprep.subr.mxu0 0.0
    %1131 = vmatpush1.msra.mxu0 0.0
    %1132 = vmatprep.subr.mxu0 0.0
    %1133 = vmatpush1.msra.mxu0 0.0
    %1134 = vmatprep.subr.mxu0 0.0
    %1135 = vmatpush1.msra.mxu0 0.0
    %1136 = vmatprep.subr.mxu0 0.0
    %1137 = vmatpush1.msra.mxu0 0.0
    %1138 = vmatprep.subr.mxu0 0.0
    %1139 = vmatpush1.msra.mxu0 0.0
    %1140 = vmatprep.subr.mxu0 0.0
    %1141 = vmatpush1.msra.mxu0 0.0
    %1142 = vmatprep.subr.mxu0 0.0
    %1143 = vmatpush1.msra.mxu0 0.0
    %1144 = vmatprep.subr.mxu0 0.0
    %1145 = vmatpush1.msra.mxu0 0.0
    %1146 = vmatprep.subr.mxu0 0.0
    %1147 = vmatpush1.msra.mxu0 0.0
    %1148 = vmatprep.subr.mxu0 0.0
    %1149 = vmatpush1.msra.mxu0 0.0
    %1150 = vmatprep.subr.mxu0 0.0
    %1151 = vmatpush1.msra.mxu0 0.0
    %1152 = vmatprep.subr.mxu0 0.0
    %1153 = vmatpush1.msra.mxu0 0.0
    %1154 = vmatprep.subr.mxu0 0.0
    %1155 = vmatpush1.msra.mxu0 0.0
    %1156 = vmatprep.subr.mxu0 0.0
    %1157 = vmatpush1.msra.mxu0 0.0
    %1158 = vmatprep.mubr.f32.mxu0 0.0
    %1159 = vmatmul.mubr.f32.gmra.mrb[0].mxu0 %v427
    %v1160 = vpop.f32.mrb[0].mxu0
    %v1161 = vadd.f32 0.0, %v1160
    %v1162 = vpop.f32.mrb[0].mxu0
    %1163 = vmatprep.mubr.f32.mxu0 0.0
    %1164 = vmatmul.mubr.f32.gmra.mrb[0].mxu0 %v430
    %v1165 = vpop.f32.mrb[0].mxu0
    %v1166 = vadd.f32 0.0, %v1165
    %v1167 = vpop.f32.mrb[0].mxu0
    %1168 = vmatprep.mubr.f32.mxu0 0.0
    %1169 = vmatmul.mubr.f32.gmra.mrb[0].mxu0 %v433
    %v1170 = vpop.f32.mrb[0].mxu0
    %v1171 = vadd.f32 0.0, %v1170
    %v1172 = vpop.f32.mrb[0].mxu0
    %1173 = vmatprep.mubr.f32.mxu0 0.0
    %1174 = vmatmul.mubr.f32.gmra.mrb[0].mxu0 %v436
    %v1175 = vpop.f32.mrb[0].mxu0
    %v1176 = vadd.f32 0.0, %v1175
    %v1177 = vpop.f32.mrb[0].mxu0
    %1178 = vmatprep.mubr.f32.mxu0 0.0
    %1179 = vmatmul.mubr.f32.gmra.mrb[0].mxu0 %v439
    %v1180 = vpop.f32.mrb[0].mxu0
    %v1181 = vadd.f32 0.0, %v1180
    %v1182 = vpop.f32.mrb[0].mxu0
    %1183 = vmatprep.mubr.f32.mxu0 0.0
    %1184 = vmatmul.mubr.f32.gmra.mrb[0].mxu0 %v442
    %v1185 = vpop.f32.mrb[0].mxu0
    %v1186 = vadd.f32 0.0, %v1185
    %v1187 = vpop.f32.mrb[0].mxu0
    %1188 = vdwg.mxu0
    %v1189 = vadd.f32 %v1066, %v1161
    %v1190 = vadd.f32 %v1071, %v1166
    %v1191 = vadd.f32 %v1076, %v1171
    %v1192 = vadd.f32 %v1081, %v1176
    %v1193 = vadd.f32 %v1086, %v1181
    %v1194 = vadd.f32 %v1091, %v1186
    %vm1195 = vcmp.gt.f32.partialorder %v1189, 0.0
    %vm1196 = vcmp.gt.f32.partialorder %v1190, 0.0
    %vm1197 = vcmp.gt.f32.partialorder %v1191, 0.0
    %vm1198 = vcmp.gt.f32.partialorder %v1192, 0.0
    %vm1199 = vcmp.gt.f32.partialorder %v1193, 0.0
    %vm1200 = vcmp.gt.f32.partialorder %v1194, 0.0
    %v1201 = vmul.f32 %v1189, 0.2
    %v1202 = vmul.f32 %v1190, 0.2
    %v1203 = vmul.f32 %v1191, 0.2
    %v1204 = vmul.f32 %v1192, 0.2
    %v1205 = vmul.f32 %v1193, 0.2
    %v1206 = vmul.f32 %v1194, 0.2
    %v1207 = vsel %vm1195, %v1189, %v1201
    %v1208 = vsel %vm1196, %v1190, %v1202
    %v1209 = vsel %vm1197, %v1191, %v1203
    %v1210 = vsel %vm1198, %v1192, %v1204
    %v1211 = vsel %vm1199, %v1193, %v1205
    %v1212 = vsel %vm1200, %v1194, %v1206
    %v1213 = vld [vmem:[%s13] sm:$0x1]
    %v1215 = vlaneseq
    %v1216 = vshrl.u32 %v1215, 7
    %v1217 = vsub.s32 0, %v1216
    %v1218 = vrot.slane %v1213, %v1217
    %v1220 = vmul.f32 %v1207, %v1218
    %v1221 = vmul.f32 %v1208, %v1218
    %v1222 = vmul.f32 %v1209, %v1218
    %v1223 = vmul.f32 %v1210, %v1218
    %v1224 = vmul.f32 %v1211, %v1218
    %v1225 = vmul.f32 %v1212, %v1218
    %v1226 = vsel %vm576, %v1220, 0.0
    %1227 = vadd.xlane.f32.xlu0 %v1226
    %v1228 = vpop.xlane.xlu0 %1227
    %v1229 = vsel %vm576, %v1221, 0.0
    %1230 = vadd.xlane.f32.xlu0 %v1229
    %v1231 = vpop.xlane.xlu0 %1230
    %v1232 = vsel %vm576, %v1222, 0.0
    %1233 = vadd.xlane.f32.xlu0 %v1232
    %v1234 = vpop.xlane.xlu0 %1233
    %v1235 = vsel %vm576, %v1223, 0.0
    %1236 = vadd.xlane.f32.xlu0 %v1235
    %v1237 = vpop.xlane.xlu0 %1236
    %v1238 = vsel %vm576, %v1224, 0.0
    %1239 = vadd.xlane.f32.xlu0 %v1238
    %v1240 = vpop.xlane.xlu0 %1239
    %v1241 = vsel %vm576, %v1225, 0.0
    %1242 = vadd.xlane.f32.xlu0 %v1241
    %v1243 = vpop.xlane.xlu0 %1242
    %v1244 = vsel %vm107, %v1228, -1e+30
    %v1245 = vsel %vm108, %v1231, -1e+30
    %v1246 = vsel %vm109, %v1234, -1e+30
    %v1247 = vsel %vm110, %v1237, -1e+30
    %v1248 = vsel %vm111, %v1240, -1e+30
    %v1249 = vsel %vm112, %v1243, -1e+30
    %v1250 = vsel %vm312, %v1244, -inf
    %v1251 = vsel %vm312, %v1245, -inf
    %v1252 = vsel %vm312, %v1246, -inf
    %v1253 = vsel %vm312, %v1247, -inf
    %v1254 = vsel %vm312, %v1248, -inf
    %v1255 = vmax.f32 %v1250, %v1254
    %v1256 = vsel %vm312, %v1249, -inf
    %v1257 = vmax.f32 %v1251, %v1256
    %v1258 = vmax.f32 %v1255, %v1257
    %v1259 = vmax.f32 %v1252, %v1253
    %v1260 = vmax.f32 %v1258, %v1259
    %v1261 = vrot.slane %v1260, 4
    %v1262 = vmax.f32 %v1260, %v1261
    %v1263 = vrot.slane %v1262, 2
    %v1264 = vmax.f32 %v1262, %v1263
    %v1265 = vrot.slane %v1264, 1
    %v1266 = vmax.f32 %v1264, %v1265
    %v1267 = vsel %vm107, %v1266, 0.0
    %v1268 = vsel %vm108, %v1266, 0.0
    %v1269 = vsel %vm109, %v1266, 0.0
    %v1270 = vsel %vm110, %v1266, 0.0
    %v1271 = vsel %vm111, %v1266, 0.0
    %v1272 = vsel %vm112, %v1266, 0.0
    %v1273 = vsel %vm312, %v1267, 0.0
    %1274 = vadd.xlane.f32.xlu0 %v1273
    %v1275 = vpop.xlane.xlu0 %1274
    %v1276 = vsel %vm312, %v1268, 0.0
    %1277 = vadd.xlane.f32.xlu0 %v1276
    %v1278 = vpop.xlane.xlu0 %1277
    %v1279 = vsel %vm312, %v1269, 0.0
    %1280 = vadd.xlane.f32.xlu0 %v1279
    %v1281 = vpop.xlane.xlu0 %1280
    %v1282 = vsel %vm312, %v1270, 0.0
    %1283 = vadd.xlane.f32.xlu0 %v1282
    %v1284 = vpop.xlane.xlu0 %1283
    %v1285 = vsel %vm312, %v1271, 0.0
    %1286 = vadd.xlane.f32.xlu0 %v1285
    %v1287 = vpop.xlane.xlu0 %1286
    %v1288 = vsel %vm312, %v1272, 0.0
    %1289 = vadd.xlane.f32.xlu0 %v1288
    %v1290 = vpop.xlane.xlu0 %1289
    %v1291 = vsub.f32 %v1228, %v1275
    %v1292 = vsub.f32 %v1231, %v1278
    %v1293 = vsub.f32 %v1234, %v1281
    %v1294 = vsub.f32 %v1237, %v1284
    %v1295 = vsub.f32 %v1240, %v1287
    %v1296 = vsub.f32 %v1243, %v1290
    %v1297 = vmul.f32 %v1291, 1.442695
    %v1298 = vpow.pop %v1297
    %v1299 = vmul.f32 %v1292, 1.442695
    %v1300 = vpow.pop %v1299
    %v1301 = vmul.f32 %v1293, 1.442695
    %v1302 = vpow.pop %v1301
    %v1303 = vmul.f32 %v1294, 1.442695
    %v1304 = vpow.pop %v1303
    %v1305 = vmul.f32 %v1295, 1.442695
    %v1306 = vpow.pop %v1305
    %v1307 = vmul.f32 %v1296, 1.442695
    %v1308 = vpow.pop %v1307
    %v1309 = vmul.f32 %v1298, %v1066
    %v1310 = vmul.f32 %v1300, %v1071
    %v1311 = vmul.f32 %v1302, %v1076
    %v1312 = vmul.f32 %v1304, %v1081
    %v1313 = vmul.f32 %v1306, %v1086
    %v1314 = vmul.f32 %v1308, %v1091
    %1315 = vmatprep.subr.mxu0 0.0
    %1316 = vmatpush1.msra.mxu0 %v1309
    %1317 = vmatprep.subr.mxu0 0.0
    %1318 = vmatpush1.msra.mxu0 %v1310
    %1319 = vmatprep.subr.mxu0 0.0
    %1320 = vmatpush1.msra.mxu0 %v1311
    %1321 = vmatprep.subr.mxu0 0.0
    %1322 = vmatpush1.msra.mxu0 %v1312
    %1323 = vmatprep.subr.mxu0 0.0
    %1324 = vmatpush1.msra.mxu0 %v1313
    %1325 = vmatprep.subr.mxu0 0.0
    %1326 = vmatpush1.msra.mxu0 %v1314
    %1327 = vmatprep.subr.mxu0 0.0
    %1328 = vmatpush1.msra.mxu0 0.0
    %1329 = vmatprep.subr.mxu0 0.0
    %1330 = vmatpush1.msra.mxu0 0.0
    %1331 = vmatprep.subr.mxu0 0.0
    %1332 = vmatpush1.msra.mxu0 0.0
    %1333 = vmatprep.subr.mxu0 0.0
    %1334 = vmatpush1.msra.mxu0 0.0
    %1335 = vmatprep.subr.mxu0 0.0
    %1336 = vmatpush1.msra.mxu0 0.0
    %1337 = vmatprep.subr.mxu0 0.0
    %1338 = vmatpush1.msra.mxu0 0.0
    %1339 = vmatprep.subr.mxu0 0.0
    %1340 = vmatpush1.msra.mxu0 0.0
    %1341 = vmatprep.subr.mxu0 0.0
    %1342 = vmatpush1.msra.mxu0 0.0
    %1343 = vmatprep.subr.mxu0 0.0
    %1344 = vmatpush1.msra.mxu0 0.0
    %1345 = vmatprep.subr.mxu0 0.0
    %1346 = vmatpush1.msra.mxu0 0.0
    %1347 = vmatprep.subr.mxu0 0.0
    %1348 = vmatpush1.msra.mxu0 0.0
    %1349 = vmatprep.subr.mxu0 0.0
    %1350 = vmatpush1.msra.mxu0 0.0
    %1351 = vmatprep.subr.mxu0 0.0
    %1352 = vmatpush1.msra.mxu0 0.0
    %1353 = vmatprep.subr.mxu0 0.0
    %1354 = vmatpush1.msra.mxu0 0.0
    %1355 = vmatprep.subr.mxu0 0.0
    %1356 = vmatpush1.msra.mxu0 0.0
    %1357 = vmatprep.subr.mxu0 0.0
    %1358 = vmatpush1.msra.mxu0 0.0
    %1359 = vmatprep.subr.mxu0 0.0
    %1360 = vmatpush1.msra.mxu0 0.0
    %1361 = vmatprep.subr.mxu0 0.0
    %1362 = vmatpush1.msra.mxu0 0.0
    %1363 = vmatprep.subr.mxu0 0.0
    %1364 = vmatpush1.msra.mxu0 0.0
    %1365 = vmatprep.subr.mxu0 0.0
    %1366 = vmatpush1.msra.mxu0 0.0
    %1367 = vmatprep.subr.mxu0 0.0
    %1368 = vmatpush1.msra.mxu0 0.0
    %1369 = vmatprep.subr.mxu0 0.0
    %1370 = vmatpush1.msra.mxu0 0.0
    %1371 = vmatprep.subr.mxu0 0.0
    %1372 = vmatpush1.msra.mxu0 0.0
    %1373 = vmatprep.subr.mxu0 0.0
    %1374 = vmatpush1.msra.mxu0 0.0
    %1375 = vmatprep.subr.mxu0 0.0
    %1376 = vmatpush1.msra.mxu0 0.0
    %1377 = vmatprep.subr.mxu0 0.0
    %1378 = vmatpush1.msra.mxu0 0.0
    %1379 = vmatprep.mubr.f32.mxu0 0.0
    %1380 = vmatmul.mubr.f32.gmra.mrb[0].mxu0 %v700
    %v1381 = vpop.f32.mrb[0].mxu0
    %v1382 = vadd.f32 0.0, %v1381
    %v1383 = vpop.f32.mrb[0].mxu0
    %1384 = vmatprep.mubr.f32.mxu0 0.0
    %1385 = vmatmul.mubr.f32.gmra.mrb[0].mxu0 %v703
    %v1386 = vpop.f32.mrb[0].mxu0
    %v1387 = vadd.f32 0.0, %v1386
    %v1388 = vpop.f32.mrb[0].mxu0
    %1389 = vdwg.mxu0
    %vm1390 = vcmp.gt.f32.partialorder %v1382, 0.0
    %vm1391 = vcmp.gt.f32.partialorder %v1387, 0.0
    %v1392 = vsel %vm1390, %v1382, 1.0
    %v1393 = vsel %vm1391, %v1387, 1.0
    %v1394 = vrcp.pop %v1392
    %v1395 = vrcp.pop %v1393
    %1397 = vset.pattern.permute.xlu0 32
    %1398 = vperm.xlu0 %1397, %v1394
    %v1399 = vpop.permute.xlu0 %1398
    %1402 = vset.pattern.permute.xlu0 32
    %1403 = vperm.xlu0 %1402, %v1395
    %v1404 = vpop.permute.xlu0 %1403
    %v1406 = vmul.f32 %v1382, %v1399
    %v1407 = vmul.f32 %v1387, %v1404
    %v1408 = vsel %vm1390, 1, 0
    %v1409 = vsel %vm1391, 1, 0
    %1410 = vset.pattern.permute.xlu0 32
    %1411 = vperm.xlu0 %1410, %v1408
    %v1412 = vpop.permute.xlu0 %1411
    %1413 = vset.pattern.permute.xlu0 32
    %1414 = vperm.xlu0 %1413, %v1409
    %v1415 = vpop.permute.xlu0 %1414
    %vm1416 = vcmp.eq.s32.totalorder %v1412, 1
    %vm1417 = vcmp.eq.s32.totalorder %v1415, 1
    %v1418 = vsel %vm1416, %v1406, 0.0
    %v1419 = vsel %vm1417, %v1407, 0.0
    %v1420 = vld [vmem:[%s14] sm:$0x1]
    %v1422 = vlaneseq
    %v1423 = vshrl.u32 %v1422, 7
    %v1424 = vsub.s32 0, %v1423
    %v1425 = vrot.slane %v1420, %v1424
    %v1427 = vadd.f32 %v1418, %v1425
    %v1428 = vadd.f32 %v1419, %v1425
    %1429 = vst.msk [vmem:[#allocation2] sm:$0xff] %vm576, %v1427
    %1430 = vst.msk [vmem:[#allocation2 + $0x8] sm:$0xff] %vm576, %v1428
    // Predicated region
    $region62: #{gnn_encoder_forward.1} parent=1 // pred_check
      _
    $region63: #{gnn_encoder_forward.1} parent=1 // pred_check_branch
      %1432 = sbr.rel (0) target = $region65
    $region64: #{gnn_encoder_forward.1} parent=1 // pred_region
      %s1434 = ssub.s32 256, 256
      %1435 = vsyncadd [#allocation3], %s1434
      %s1436 = sshll.u32 [#allocation2], 4
      %s1437 = int_to_ptr.vmem [resolvable:$true] %s1436
      %1442 = dma.vmem_to_hbm [thread:$0]  %s1437, 256, %s15, [#allocation3], 128, 128, 8
    $region65: #{gnn_encoder_forward.1} parent=1 // pred_fallthru
      _
    // Predicated region
    $region66: #{gnn_encoder_forward.1} parent=1 // pred_check
      _
    $region67: #{gnn_encoder_forward.1} parent=1 // pred_check_branch
      %1444 = sbr.rel (0) target = $region69
    $region68: #{gnn_encoder_forward.1} parent=1 // pred_region
      %1445 = dma.done [#allocation3], 256
    $region69: #{gnn_encoder_forward.1} parent=1 // pred_fallthru
      _
    %1446 = vsyncpa [#allocation3], 1

</llo_original>
